<compile_context>
chip_gen: v7x
topology: tpu7x:2x2x1
jax: 0.10.0
libtpu: 0.0.40
codegen_flags: <defaults>
</compile_context>

<pallas_src>
import jax
import jax.numpy as jnp
from jax import lax
from jax.experimental import pallas as pl
from jax.experimental.pallas import tpu as pltpu

# ---------------- config (small, consistent with the module) ----------------
BATCH = 2
SEQ = 8            # context_length
EMB_DIM = 32       # emb_dim
N_HEADS = 4        # n_heads
HEAD_DIM = EMB_DIM // N_HEADS
EPS = 1e-5
NEG_BIG = -1e30    # large finite negative for masking (never -inf - -inf -> NaN)


# ---------------------------- in-kernel helpers -----------------------------
def _layernorm(x, scale, shift):
    mean = jnp.mean(x, axis=-1, keepdims=True)
    var = jnp.mean((x - mean) ** 2, axis=-1, keepdims=True)   # unbiased=False
    return (x - mean) * lax.rsqrt(var + EPS) * scale + shift  # rsqrt -> EUP


def _gelu_tanh(x):
    c = jnp.sqrt(jnp.float32(2.0 / jnp.pi))
    return 0.5 * x * (1.0 + jnp.tanh(c * (x + 0.044715 * x * x * x)))


# --------------------------------- kernel -----------------------------------
def transformer_block_kernel(
    x_ref,                       # (T, D)   f32 activations (one batch)
    bias_ref,                    # (T, T)   f32 additive causal bias (0 / -1e30)
    hmask_ref,                   # (H, D)   bf16 one-hot head mask
    ln1_s_ref, ln1_b_ref,        # (1, D)   f32
    wq_ref, bq_ref,              # (D, D) bf16 (scale folded in), (1, D) f32
    wk_ref, bk_ref,              # (D, D) bf16, (1, D) f32
    wv_ref, bv_ref,              # (D, D) bf16, (1, D) f32
    wo_ref, bo_ref,              # (D, D) bf16, (1, D) f32
    ln2_s_ref, ln2_b_ref,        # (1, D)   f32
    w1_ref, b1_ref,              # (D, 4D) bf16, (1, 4D) f32
    w2_ref, b2_ref,              # (4D, D) bf16, (1, D) f32
    out_ref,                     # (T, D)   f32
):
    f32 = jnp.float32
    bf16 = jnp.bfloat16

    x = x_ref[...]                                   # (T, D) f32
    t, d = x.shape
    n_heads = hmask_ref.shape[0]

    # ---------------- LN1 (f32 on the VPU, rsqrt on the EUP) ----------------
    h = _layernorm(x, ln1_s_ref[...], ln1_b_ref[...])
    h16 = h.astype(bf16)                             # cast once, reused 3x

    # ----- Q/K/V: three full-width 2-D matmuls (no per-head batching, -------
    # ----- no lane slicing); 1/sqrt(Hd) is already folded into wq/bq --------
    q = (jnp.dot(h16, wq_ref[...], preferred_element_type=f32)
         + bq_ref[...]).astype(bf16)                 # (T, D)
    k = (jnp.dot(h16, wk_ref[...], preferred_element_type=f32)
         + bk_ref[...]).astype(bf16)
    v = (jnp.dot(h16, wv_ref[...], preferred_element_type=f32)
         + bv_ref[...]).astype(bf16)

    # ---- per-head attention via a one-hot head mask on K/V columns ---------
    # (keeps everything in the concatenated-heads layout: no reshape/transpose)
    hmask = hmask_ref[...]                           # (H, D) bf16
    q_b = jnp.broadcast_to(q, (n_heads, t, d))       # (H, T, D)
    k_m = k[None, :, :] * hmask[:, None, :]          # (H, T, D)  zeros outside head
    v_m = v[None, :, :] * hmask[:, None, :]          # (H, T, D)

    s = jnp.einsum("htd,hsd->hts", q_b, k_m,
                   preferred_element_type=f32)       # (H, T, T)
    s = s + bias_ref[...][None, :, :]                # additive causal mask
    s = s - jnp.max(s, axis=-1, keepdims=True)       # stable softmax
    e = jnp.exp(s)
    p = e / jnp.sum(e, axis=-1, keepdims=True)       # exact reciprocal (parity)

    # PV with head-masked V -> partial contexts sum directly to the (T, D)
    # concatenated-heads context (each output column is nonzero in one head).
    ctx = jnp.sum(
        jnp.einsum("hts,hsd->htd", p.astype(bf16), v_m,
                   preferred_element_type=f32),
        axis=0)                                      # (T, D) f32

    # --------- output projection: one (T,D)@(D,D) matmul, K = 32 ------------
    attn_out = jnp.dot(ctx.astype(bf16), wo_ref[...],
                       preferred_element_type=f32) + bo_ref[...]
    # drop_resid: identity (drop_rate = 0.0)
    x1 = x + attn_out

    # ------------------------- LN2 + FeedForward ----------------------------
    h2 = _layernorm(x1, ln2_s_ref[...], ln2_b_ref[...])
    ff = jnp.dot(h2.astype(bf16), w1_ref[...],
                 preferred_element_type=f32) + b1_ref[...]
    ff = _gelu_tanh(ff)                              # f32 elementwise / EUP tanh
    ff = jnp.dot(ff.astype(bf16), w2_ref[...],
                 preferred_element_type=f32) + b2_ref[...]
    out_ref[...] = x1 + ff


# --------------------------------- wrapper ----------------------------------
def transformer_block(x, p):
    B, T, D = x.shape
    H, Hd = N_HEADS, HEAD_DIM
    bf16 = jnp.bfloat16
    scale = 1.0 / float(Hd) ** 0.5

    # ------------------ host-side weight / constant prep --------------------
    wq = (p["wq"] * scale).astype(bf16)              # fold 1/sqrt(Hd) into Q
    bq = p["bq"] * scale
    wk = p["wk"].astype(bf16)
    wv = p["wv"].astype(bf16)
    wo = p["wo"].astype(bf16)

    # (T, T) additive causal bias: 0 on/below the diagonal, -1e30 above.
    causal_bias = jnp.where(jnp.triu(jnp.ones((T, T), dtype=bool), k=1),
                            jnp.float32(NEG_BIG), jnp.float32(0.0))

    # (H, D) one-hot head mask: hmask[h, j] = 1 iff column j belongs to head h.
    hmask = (jnp.arange(D)[None, :] // Hd
             == jnp.arange(H)[:, None]).astype(bf16)

    args = [
        x, causal_bias, hmask,
        p["ln1_scale"], p["ln1_shift"],
        wq, bq, wk, p["bk"], wv, p["bv"],
        wo, p["bo"],
        p["ln2_scale"], p["ln2_shift"],
        p["w1"].astype(bf16), p["b1"],
        p["w2"].astype(bf16), p["b2"],
    ]

    def full_spec(a):
        # constant block index -> weight/constant block stays resident in VMEM
        return pl.BlockSpec(a.shape, lambda b: (0,) * a.ndim)

    in_specs = ([pl.BlockSpec((None, T, D), lambda b: (b, 0, 0))]
                + [full_spec(a) for a in args[1:]])
    out_specs = pl.BlockSpec((None, T, D), lambda b: (b, 0, 0))

    out = pl.pallas_call(
        transformer_block_kernel,
        out_shape=jax.ShapeDtypeStruct((B, T, D), x.dtype),
        grid=(B,),                                   # one batch per grid step
        in_specs=in_specs,
        out_specs=out_specs,
        compiler_params=pltpu.CompilerParams(
            dimension_semantics=("parallel",)),      # megacore / v7x 2nd TC
    )(*args)
    return out


# --------------------------- pure-JAX reference ------------------------------
def reference_transformer_block(x, p):
    def ln(z, s, b):
        m = jnp.mean(z, -1, keepdims=True)
        v = jnp.mean((z - m) ** 2, -1, keepdims=True)
        return (z - m) / jnp.sqrt(v + EPS) * s + b

    def gelu(z):
        c = jnp.sqrt(jnp.float32(2.0 / jnp.pi))
        return 0.5 * z * (1.0 + jnp.tanh(c * (z + 0.044715 * z ** 3)))

    B, T, D = x.shape
    H, Hd = N_HEADS, HEAD_DIM

    h = ln(x, p["ln1_scale"], p["ln1_shift"])
    q = h @ p["wq"] + p["bq"]
    k = h @ p["wk"] + p["bk"]
    v = h @ p["wv"] + p["bv"]
    q = q.reshape(B, T, H, Hd).transpose(0, 2, 1, 3)
    k = k.reshape(B, T, H, Hd).transpose(0, 2, 1, 3)
    v = v.reshape(B, T, H, Hd).transpose(0, 2, 1, 3)
    s = (q @ k.transpose(0, 1, 3, 2)) / jnp.sqrt(jnp.float32(Hd))
    mask = jnp.triu(jnp.ones((T, T), dtype=bool), k=1)
    s = jnp.where(mask, -jnp.inf, s)
    attn = jax.nn.softmax(s, axis=-1)
    ctx = (attn @ v).transpose(0, 2, 1, 3).reshape(B, T, D)
    attn_out = ctx @ p["wo"] + p["bo"]
    x1 = x + attn_out
    h2 = ln(x1, p["ln2_scale"], p["ln2_shift"])
    ff = gelu(h2 @ p["w1"] + p["b1"]) @ p["w2"] + p["b2"]
    return x1 + ff


# ------------------------------- param init ----------------------------------
def init_params(key):
    D, F = EMB_DIM, 4 * EMB_DIM
    ks = jax.random.split(key, 10)

    def w(k, shape):
        return 0.02 * jax.random.normal(k, shape, jnp.float32)

    return {
        "ln1_scale": jnp.ones((1, D), jnp.float32),
        "ln1_shift": jnp.zeros((1, D), jnp.float32),
        # Linear weights stored as (in, out) so forward is x @ W + b
        "wq": w(ks[0], (D, D)), "bq": w(ks[1], (1, D)),   # qkv_bias=True
        "wk": w(ks[2], (D, D)), "bk": w(ks[3], (1, D)),
        "wv": w(ks[4], (D, D)), "bv": w(ks[5], (1, D)),
        "wo": w(ks[6], (D, D)), "bo": jnp.zeros((1, D), jnp.float32),
        "ln2_scale": jnp.ones((1, D), jnp.float32),
        "ln2_shift": jnp.zeros((1, D), jnp.float32),
        "w1": w(ks[7], (D, F)), "b1": jnp.zeros((1, F), jnp.float32),
        "w2": w(ks[8], (F, D)), "b2": jnp.zeros((1, D), jnp.float32),
    }


if __name__ == "__main__":
    key = jax.random.PRNGKey(0)
    k_x, k_p = jax.random.split(key)
    x = jax.random.normal(k_x, (BATCH, SEQ, EMB_DIM), jnp.float32)
    params = init_params(k_p)

    out = jax.jit(transformer_block)(x, params)
    out = jax.block_until_ready(out)

    ref = reference_transformer_block(x, params)
    assert out.shape == (BATCH, SEQ, EMB_DIM)
    # bf16 MXU operands vs. full-f32 reference: ~1e-3 relative error
    assert jnp.allclose(out, ref, rtol=1e-2, atol=1e-2), "mismatch vs reference"

    print("KERNEL_OK")
</pallas_src>

<mosaic_0001>
module attributes {stable_mosaic.version = 11 : i64} {
  func.func @transformer_block_kernel(%arg0: i32, %arg1: memref<1x8x32xf32, #tpu.memory_space<vmem>>, %arg2: memref<8x8xf32, #tpu.memory_space<vmem>>, %arg3: memref<4x32xbf16, #tpu.memory_space<vmem>>, %arg4: memref<1x32xf32, #tpu.memory_space<vmem>>, %arg5: memref<1x32xf32, #tpu.memory_space<vmem>>, %arg6: memref<32x32xbf16, #tpu.memory_space<vmem>>, %arg7: memref<1x32xf32, #tpu.memory_space<vmem>>, %arg8: memref<32x32xbf16, #tpu.memory_space<vmem>>, %arg9: memref<1x32xf32, #tpu.memory_space<vmem>>, %arg10: memref<32x32xbf16, #tpu.memory_space<vmem>>, %arg11: memref<1x32xf32, #tpu.memory_space<vmem>>, %arg12: memref<32x32xbf16, #tpu.memory_space<vmem>>, %arg13: memref<1x32xf32, #tpu.memory_space<vmem>>, %arg14: memref<1x32xf32, #tpu.memory_space<vmem>>, %arg15: memref<1x32xf32, #tpu.memory_space<vmem>>, %arg16: memref<32x128xbf16, #tpu.memory_space<vmem>>, %arg17: memref<1x128xf32, #tpu.memory_space<vmem>>, %arg18: memref<128x32xbf16, #tpu.memory_space<vmem>>, %arg19: memref<1x32xf32, #tpu.memory_space<vmem>>, %arg20: memref<1x8x32xf32, #tpu.memory_space<vmem>>) attributes {dimension_semantics = [#tpu.dimension_semantics<parallel>], iteration_bounds = array<i64: 2>, scalar_prefetch = 0 : i64, scratch_operands = 0 : i64, tpu.core_type = #tpu.core_type<tc>, window_params = [{transform_indices = @transform_0, window_bounds = array<i64: 1, 8, 32>}, {pipeline_mode = #tpu.pipeline_mode<synchronous>, transform_indices = @transform_1, window_bounds = array<i64: 8, 8>}, {pipeline_mode = #tpu.pipeline_mode<synchronous>, transform_indices = @transform_2, window_bounds = array<i64: 4, 32>}, {pipeline_mode = #tpu.pipeline_mode<synchronous>, transform_indices = @transform_3, window_bounds = array<i64: 1, 32>}, {pipeline_mode = #tpu.pipeline_mode<synchronous>, transform_indices = @transform_4, window_bounds = array<i64: 1, 32>}, {pipeline_mode = #tpu.pipeline_mode<synchronous>, transform_indices = @transform_5, window_bounds = array<i64: 32, 32>}, {pipeline_mode = #tpu.pipeline_mode<synchronous>, transform_indices = @transform_6, window_bounds = array<i64: 1, 32>}, {pipeline_mode = #tpu.pipeline_mode<synchronous>, transform_indices = @transform_7, window_bounds = array<i64: 32, 32>}, {pipeline_mode = #tpu.pipeline_mode<synchronous>, transform_indices = @transform_8, window_bounds = array<i64: 1, 32>}, {pipeline_mode = #tpu.pipeline_mode<synchronous>, transform_indices = @transform_9, window_bounds = array<i64: 32, 32>}, {pipeline_mode = #tpu.pipeline_mode<synchronous>, transform_indices = @transform_10, window_bounds = array<i64: 1, 32>}, {pipeline_mode = #tpu.pipeline_mode<synchronous>, transform_indices = @transform_11, window_bounds = array<i64: 32, 32>}, {pipeline_mode = #tpu.pipeline_mode<synchronous>, transform_indices = @transform_12, window_bounds = array<i64: 1, 32>}, {pipeline_mode = #tpu.pipeline_mode<synchronous>, transform_indices = @transform_13, window_bounds = array<i64: 1, 32>}, {pipeline_mode = #tpu.pipeline_mode<synchronous>, transform_indices = @transform_14, window_bounds = array<i64: 1, 32>}, {pipeline_mode = #tpu.pipeline_mode<synchronous>, transform_indices = @transform_15, window_bounds = array<i64: 32, 128>}, {pipeline_mode = #tpu.pipeline_mode<synchronous>, transform_indices = @transform_16, window_bounds = array<i64: 1, 128>}, {pipeline_mode = #tpu.pipeline_mode<synchronous>, transform_indices = @transform_17, window_bounds = array<i64: 128, 32>}, {pipeline_mode = #tpu.pipeline_mode<synchronous>, transform_indices = @transform_18, window_bounds = array<i64: 1, 32>}, {transform_indices = @transform_19, window_bounds = array<i64: 1, 8, 32>}]} {
    %c0 = arith.constant 0 : index
    %c0_0 = arith.constant 0 : index
    %c0_1 = arith.constant 0 : index
    %0 = vector.load %arg1[%c0, %c0_0, %c0_1] : memref<1x8x32xf32, #tpu.memory_space<vmem>>, vector<1x8x32xf32>
    %1 = vector.shape_cast %0 : vector<1x8x32xf32> to vector<8x32xf32>
    %c0_2 = arith.constant 0 : index
    %c0_3 = arith.constant 0 : index
    %2 = vector.load %arg4[%c0_2, %c0_3] : memref<1x32xf32, #tpu.memory_space<vmem>>, vector<1x32xf32>
    %c0_4 = arith.constant 0 : index
    %c0_5 = arith.constant 0 : index
    %3 = vector.load %arg5[%c0_4, %c0_5] : memref<1x32xf32, #tpu.memory_space<vmem>>, vector<1x32xf32>
    %cst = arith.constant dense<0.000000e+00> : vector<8xf32>
    %4 = vector.multi_reduction <add>, %1, %cst [1] : vector<8x32xf32> to vector<8xf32>
    %5 = vector.shape_cast %4 : vector<8xf32> to vector<8x1xf32>
    %cst_6 = arith.constant 3.200000e+01 : f32
    %6 = vector.broadcast %cst_6 : f32 to vector<8x1xf32>
    %7 = arith.divf %5, %6 : vector<8x1xf32>
    %8 = vector.broadcast %7 : vector<8x1xf32> to vector<8x32xf32>
    %9 = arith.subf %1, %8 : vector<8x32xf32>
    %10 = arith.mulf %9, %9 : vector<8x32xf32>
    %cst_7 = arith.constant dense<0.000000e+00> : vector<8xf32>
    %11 = vector.multi_reduction <add>, %10, %cst_7 [1] : vector<8x32xf32> to vector<8xf32>
    %12 = vector.shape_cast %11 : vector<8xf32> to vector<8x1xf32>
    %cst_8 = arith.constant 3.200000e+01 : f32
    %13 = vector.broadcast %cst_8 : f32 to vector<8x1xf32>
    %14 = arith.divf %12, %13 : vector<8x1xf32>
    %15 = vector.broadcast %7 : vector<8x1xf32> to vector<8x32xf32>
    %16 = arith.subf %1, %15 : vector<8x32xf32>
    %cst_9 = arith.constant 9.99999974E-6 : f32
    %17 = vector.broadcast %cst_9 : f32 to vector<8x1xf32>
    %18 = arith.addf %14, %17 : vector<8x1xf32>
    %19 = math.rsqrt %18 : vector<8x1xf32>
    %20 = vector.broadcast %19 : vector<8x1xf32> to vector<8x32xf32>
    %21 = arith.mulf %16, %20 : vector<8x32xf32>
    %22 = vector.broadcast %2 : vector<1x32xf32> to vector<8x32xf32>
    %23 = arith.mulf %21, %22 : vector<8x32xf32>
    %24 = vector.broadcast %3 : vector<1x32xf32> to vector<8x32xf32>
    %25 = arith.addf %23, %24 : vector<8x32xf32>
    %26 = arith.truncf %25 : vector<8x32xf32> to vector<8x32xbf16>
    %c0_10 = arith.constant 0 : index
    %c0_11 = arith.constant 0 : index
    %27 = vector.load %arg6[%c0_10, %c0_11] : memref<32x32xbf16, #tpu.memory_space<vmem>>, vector<32x32xbf16>
    %cst_12 = arith.constant dense<0.000000e+00> : vector<8x32xf32>
    %28 = tpu.matmul %26, %27, %cst_12 {dimension_numbers = #tpu.dot_dimension_numbers<[1], [0], [0], [1], [0, 0, 1, 1], [], []>} : vector<8x32xbf16>, vector<32x32xbf16>, vector<8x32xf32> -> vector<8x32xf32>
    %c0_13 = arith.constant 0 : index
    %c0_14 = arith.constant 0 : index
    %29 = vector.load %arg7[%c0_13, %c0_14] : memref<1x32xf32, #tpu.memory_space<vmem>>, vector<1x32xf32>
    %30 = vector.broadcast %29 : vector<1x32xf32> to vector<8x32xf32>
    %31 = arith.addf %28, %30 : vector<8x32xf32>
    %32 = arith.truncf %31 : vector<8x32xf32> to vector<8x32xbf16>
    %c0_15 = arith.constant 0 : index
    %c0_16 = arith.constant 0 : index
    %33 = vector.load %arg8[%c0_15, %c0_16] : memref<32x32xbf16, #tpu.memory_space<vmem>>, vector<32x32xbf16>
    %cst_17 = arith.constant dense<0.000000e+00> : vector<8x32xf32>
    %34 = tpu.matmul %26, %33, %cst_17 {dimension_numbers = #tpu.dot_dimension_numbers<[1], [0], [0], [1], [0, 0, 1, 1], [], []>} : vector<8x32xbf16>, vector<32x32xbf16>, vector<8x32xf32> -> vector<8x32xf32>
    %c0_18 = arith.constant 0 : index
    %c0_19 = arith.constant 0 : index
    %35 = vector.load %arg9[%c0_18, %c0_19] : memref<1x32xf32, #tpu.memory_space<vmem>>, vector<1x32xf32>
    %36 = vector.broadcast %35 : vector<1x32xf32> to vector<8x32xf32>
    %37 = arith.addf %34, %36 : vector<8x32xf32>
    %38 = arith.truncf %37 : vector<8x32xf32> to vector<8x32xbf16>
    %c0_20 = arith.constant 0 : index
    %c0_21 = arith.constant 0 : index
    %39 = vector.load %arg10[%c0_20, %c0_21] : memref<32x32xbf16, #tpu.memory_space<vmem>>, vector<32x32xbf16>
    %cst_22 = arith.constant dense<0.000000e+00> : vector<8x32xf32>
    %40 = tpu.matmul %26, %39, %cst_22 {dimension_numbers = #tpu.dot_dimension_numbers<[1], [0], [0], [1], [0, 0, 1, 1], [], []>} : vector<8x32xbf16>, vector<32x32xbf16>, vector<8x32xf32> -> vector<8x32xf32>
    %c0_23 = arith.constant 0 : index
    %c0_24 = arith.constant 0 : index
    %41 = vector.load %arg11[%c0_23, %c0_24] : memref<1x32xf32, #tpu.memory_space<vmem>>, vector<1x32xf32>
    %42 = vector.broadcast %41 : vector<1x32xf32> to vector<8x32xf32>
    %43 = arith.addf %40, %42 : vector<8x32xf32>
    %44 = arith.truncf %43 : vector<8x32xf32> to vector<8x32xbf16>
    %c0_25 = arith.constant 0 : index
    %c0_26 = arith.constant 0 : index
    %45 = vector.load %arg3[%c0_25, %c0_26] : memref<4x32xbf16, #tpu.memory_space<vmem>>, vector<4x32xbf16>
    %46 = vector.shape_cast %32 : vector<8x32xbf16> to vector<1x8x32xbf16>
    %47 = vector.broadcast %46 : vector<1x8x32xbf16> to vector<4x8x32xbf16>
    %48 = vector.shape_cast %38 : vector<8x32xbf16> to vector<1x8x32xbf16>
    %49 = vector.shape_cast %45 : vector<4x32xbf16> to vector<4x1x32xbf16>
    %50 = vector.broadcast %48 : vector<1x8x32xbf16> to vector<4x8x32xbf16>
    %51 = vector.broadcast %49 : vector<4x1x32xbf16> to vector<4x8x32xbf16>
    %52 = arith.mulf %50, %51 : vector<4x8x32xbf16>
    %53 = vector.shape_cast %44 : vector<8x32xbf16> to vector<1x8x32xbf16>
    %54 = vector.shape_cast %45 : vector<4x32xbf16> to vector<4x1x32xbf16>
    %55 = vector.broadcast %53 : vector<1x8x32xbf16> to vector<4x8x32xbf16>
    %56 = vector.broadcast %54 : vector<4x1x32xbf16> to vector<4x8x32xbf16>
    %57 = arith.mulf %55, %56 : vector<4x8x32xbf16>
    "tpu.trace_start"() <{level = 10 : i32, message = "htd,hsd->hts"}> : () -> ()
    %cst_27 = arith.constant dense<0.000000e+00> : vector<4x8x8xf32>
    %58 = tpu.matmul %47, %52, %cst_27 {dimension_numbers = #tpu.dot_dimension_numbers<[2], [2], [1], [1], [0, 0, 0, 1, 1, 1], [0], [0]>} : vector<4x8x32xbf16>, vector<4x8x32xbf16>, vector<4x8x8xf32> -> vector<4x8x8xf32>
    "tpu.trace_stop"() : () -> ()
    %c0_28 = arith.constant 0 : index
    %c0_29 = arith.constant 0 : index
    %59 = vector.load %arg2[%c0_28, %c0_29] : memref<8x8xf32, #tpu.memory_space<vmem>>, vector<8x8xf32>
    %60 = vector.shape_cast %59 : vector<8x8xf32> to vector<1x8x8xf32>
    %61 = vector.broadcast %60 : vector<1x8x8xf32> to vector<4x8x8xf32>
    %62 = arith.addf %58, %61 : vector<4x8x8xf32>
    %cst_30 = arith.constant dense<0xFF800000> : vector<4x8xf32>
    %63 = vector.multi_reduction <maximumf>, %62, %cst_30 [2] : vector<4x8x8xf32> to vector<4x8xf32>
    %64 = vector.shape_cast %63 : vector<4x8xf32> to vector<4x8x1xf32>
    %65 = vector.broadcast %64 : vector<4x8x1xf32> to vector<4x8x8xf32>
    %66 = arith.subf %62, %65 : vector<4x8x8xf32>
    %67 = math.exp %66 : vector<4x8x8xf32>
    %cst_31 = arith.constant dense<0.000000e+00> : vector<4x8xf32>
    %68 = vector.multi_reduction <add>, %67, %cst_31 [2] : vector<4x8x8xf32> to vector<4x8xf32>
    %69 = vector.shape_cast %68 : vector<4x8xf32> to vector<4x8x1xf32>
    %70 = vector.broadcast %69 : vector<4x8x1xf32> to vector<4x8x8xf32>
    %71 = arith.divf %67, %70 : vector<4x8x8xf32>
    %72 = arith.truncf %71 : vector<4x8x8xf32> to vector<4x8x8xbf16>
    "tpu.trace_start"() <{level = 10 : i32, message = "hts,hsd->htd"}> : () -> ()
    %cst_32 = arith.constant dense<0.000000e+00> : vector<4x8x32xf32>
    %73 = tpu.matmul %72, %57, %cst_32 {dimension_numbers = #tpu.dot_dimension_numbers<[2], [1], [1], [2], [0, 0, 0, 1, 1, 2], [0], [0]>} : vector<4x8x8xbf16>, vector<4x8x32xbf16>, vector<4x8x32xf32> -> vector<4x8x32xf32>
    "tpu.trace_stop"() : () -> ()
    %cst_33 = arith.constant dense<0.000000e+00> : vector<8x32xf32>
    %74 = vector.multi_reduction <add>, %73, %cst_33 [0] : vector<4x8x32xf32> to vector<8x32xf32>
    %75 = arith.truncf %74 : vector<8x32xf32> to vector<8x32xbf16>
    %c0_34 = arith.constant 0 : index
    %c0_35 = arith.constant 0 : index
    %76 = vector.load %arg12[%c0_34, %c0_35] : memref<32x32xbf16, #tpu.memory_space<vmem>>, vector<32x32xbf16>
    %cst_36 = arith.constant dense<0.000000e+00> : vector<8x32xf32>
    %77 = tpu.matmul %75, %76, %cst_36 {dimension_numbers = #tpu.dot_dimension_numbers<[1], [0], [0], [1], [0, 0, 1, 1], [], []>} : vector<8x32xbf16>, vector<32x32xbf16>, vector<8x32xf32> -> vector<8x32xf32>
    %c0_37 = arith.constant 0 : index
    %c0_38 = arith.constant 0 : index
    %78 = vector.load %arg13[%c0_37, %c0_38] : memref<1x32xf32, #tpu.memory_space<vmem>>, vector<1x32xf32>
    %79 = vector.broadcast %78 : vector<1x32xf32> to vector<8x32xf32>
    %80 = arith.addf %77, %79 : vector<8x32xf32>
    %81 = arith.addf %1, %80 : vector<8x32xf32>
    %c0_39 = arith.constant 0 : index
    %c0_40 = arith.constant 0 : index
    %82 = vector.load %arg14[%c0_39, %c0_40] : memref<1x32xf32, #tpu.memory_space<vmem>>, vector<1x32xf32>
    %c0_41 = arith.constant 0 : index
    %c0_42 = arith.constant 0 : index
    %83 = vector.load %arg15[%c0_41, %c0_42] : memref<1x32xf32, #tpu.memory_space<vmem>>, vector<1x32xf32>
    %cst_43 = arith.constant dense<0.000000e+00> : vector<8xf32>
    %84 = vector.multi_reduction <add>, %81, %cst_43 [1] : vector<8x32xf32> to vector<8xf32>
    %85 = vector.shape_cast %84 : vector<8xf32> to vector<8x1xf32>
    %cst_44 = arith.constant 3.200000e+01 : f32
    %86 = vector.broadcast %cst_44 : f32 to vector<8x1xf32>
    %87 = arith.divf %85, %86 : vector<8x1xf32>
    %88 = vector.broadcast %87 : vector<8x1xf32> to vector<8x32xf32>
    %89 = arith.subf %81, %88 : vector<8x32xf32>
    %90 = arith.mulf %89, %89 : vector<8x32xf32>
    %cst_45 = arith.constant dense<0.000000e+00> : vector<8xf32>
    %91 = vector.multi_reduction <add>, %90, %cst_45 [1] : vector<8x32xf32> to vector<8xf32>
    %92 = vector.shape_cast %91 : vector<8xf32> to vector<8x1xf32>
    %cst_46 = arith.constant 3.200000e+01 : f32
    %93 = vector.broadcast %cst_46 : f32 to vector<8x1xf32>
    %94 = arith.divf %92, %93 : vector<8x1xf32>
    %95 = vector.broadcast %87 : vector<8x1xf32> to vector<8x32xf32>
    %96 = arith.subf %81, %95 : vector<8x32xf32>
    %cst_47 = arith.constant 9.99999974E-6 : f32
    %97 = vector.broadcast %cst_47 : f32 to vector<8x1xf32>
    %98 = arith.addf %94, %97 : vector<8x1xf32>
    %99 = math.rsqrt %98 : vector<8x1xf32>
    %100 = vector.broadcast %99 : vector<8x1xf32> to vector<8x32xf32>
    %101 = arith.mulf %96, %100 : vector<8x32xf32>
    %102 = vector.broadcast %82 : vector<1x32xf32> to vector<8x32xf32>
    %103 = arith.mulf %101, %102 : vector<8x32xf32>
    %104 = vector.broadcast %83 : vector<1x32xf32> to vector<8x32xf32>
    %105 = arith.addf %103, %104 : vector<8x32xf32>
    %106 = arith.truncf %105 : vector<8x32xf32> to vector<8x32xbf16>
    %c0_48 = arith.constant 0 : index
    %c0_49 = arith.constant 0 : index
    %107 = vector.load %arg16[%c0_48, %c0_49] : memref<32x128xbf16, #tpu.memory_space<vmem>>, vector<32x128xbf16>
    %cst_50 = arith.constant dense<0.000000e+00> : vector<8x128xf32>
    %108 = tpu.matmul %106, %107, %cst_50 {dimension_numbers = #tpu.dot_dimension_numbers<[1], [0], [0], [1], [0, 0, 1, 1], [], []>} : vector<8x32xbf16>, vector<32x128xbf16>, vector<8x128xf32> -> vector<8x128xf32>
    %c0_51 = arith.constant 0 : index
    %c0_52 = arith.constant 0 : index
    %109 = vector.load %arg17[%c0_51, %c0_52] : memref<1x128xf32, #tpu.memory_space<vmem>>, vector<1x128xf32>
    %110 = vector.broadcast %109 : vector<1x128xf32> to vector<8x128xf32>
    %111 = arith.addf %108, %110 : vector<8x128xf32>
    %cst_53 = arith.constant 0.636619746 : f32
    %112 = math.sqrt %cst_53 : f32
    %cst_54 = arith.constant 5.000000e-01 : f32
    %113 = vector.broadcast %cst_54 : f32 to vector<8x128xf32>
    %114 = arith.mulf %113, %111 : vector<8x128xf32>
    %cst_55 = arith.constant 4.471500e-02 : f32
    %115 = vector.broadcast %cst_55 : f32 to vector<8x128xf32>
    %116 = arith.mulf %115, %111 : vector<8x128xf32>
    %117 = arith.mulf %116, %111 : vector<8x128xf32>
    %118 = arith.mulf %117, %111 : vector<8x128xf32>
    %119 = arith.addf %111, %118 : vector<8x128xf32>
    %120 = vector.broadcast %112 : f32 to vector<8x128xf32>
    %121 = arith.mulf %120, %119 : vector<8x128xf32>
    %122 = math.tanh %121 : vector<8x128xf32>
    %cst_56 = arith.constant 1.000000e+00 : f32
    %123 = vector.broadcast %cst_56 : f32 to vector<8x128xf32>
    %124 = arith.addf %123, %122 : vector<8x128xf32>
    %125 = arith.mulf %114, %124 : vector<8x128xf32>
    %126 = arith.truncf %125 : vector<8x128xf32> to vector<8x128xbf16>
    %c0_57 = arith.constant 0 : index
    %c0_58 = arith.constant 0 : index
    %127 = vector.load %arg18[%c0_57, %c0_58] : memref<128x32xbf16, #tpu.memory_space<vmem>>, vector<128x32xbf16>
    %cst_59 = arith.constant dense<0.000000e+00> : vector<8x32xf32>
    %128 = tpu.matmul %126, %127, %cst_59 {dimension_numbers = #tpu.dot_dimension_numbers<[1], [0], [0], [1], [0, 0, 1, 1], [], []>} : vector<8x128xbf16>, vector<128x32xbf16>, vector<8x32xf32> -> vector<8x32xf32>
    %c0_60 = arith.constant 0 : index
    %c0_61 = arith.constant 0 : index
    %129 = vector.load %arg19[%c0_60, %c0_61] : memref<1x32xf32, #tpu.memory_space<vmem>>, vector<1x32xf32>
    %130 = vector.broadcast %129 : vector<1x32xf32> to vector<8x32xf32>
    %131 = arith.addf %128, %130 : vector<8x32xf32>
    %132 = arith.addf %81, %131 : vector<8x32xf32>
    %c0_62 = arith.constant 0 : index
    %c0_63 = arith.constant 0 : index
    %c0_64 = arith.constant 0 : index
    %133 = vector.load %arg20[%c0_62, %c0_63, %c0_64] : memref<1x8x32xf32, #tpu.memory_space<vmem>>, vector<1x8x32xf32>
    %134 = vector.shape_cast %133 : vector<1x8x32xf32> to vector<8x32xf32>
    %135 = vector.shape_cast %132 : vector<8x32xf32> to vector<1x8x32xf32>
    tpu.vector_store %arg20[%c0_62, %c0_63, %c0_64], %135 {strides = array<i32>} : memref<1x8x32xf32, #tpu.memory_space<vmem>>, vector<1x8x32xf32>,
    return
  }
  func.func @transform_0(%arg0: i32) -> (i32, i32, i32) {
    %c0_i32 = arith.constant 0 : i32
    %c0_i32_0 = arith.constant 0 : i32
    %c0_i32_1 = arith.constant 0 : i32
    return %arg0, %c0_i32, %c0_i32_0 : i32, i32, i32
  }
  func.func @transform_1(%arg0: i32) -> (i32, i32) {
    %c0_i32 = arith.constant 0 : i32
    %c0_i32_0 = arith.constant 0 : i32
    %c0_i32_1 = arith.constant 0 : i32
    return %c0_i32, %c0_i32_0 : i32, i32
  }
  func.func @transform_2(%arg0: i32) -> (i32, i32) {
    %c0_i32 = arith.constant 0 : i32
    %c0_i32_0 = arith.constant 0 : i32
    %c0_i32_1 = arith.constant 0 : i32
    return %c0_i32, %c0_i32_0 : i32, i32
  }
  func.func @transform_3(%arg0: i32) -> (i32, i32) {
    %c0_i32 = arith.constant 0 : i32
    %c0_i32_0 = arith.constant 0 : i32
    %c0_i32_1 = arith.constant 0 : i32
    return %c0_i32, %c0_i32_0 : i32, i32
  }
  func.func @transform_4(%arg0: i32) -> (i32, i32) {
    %c0_i32 = arith.constant 0 : i32
    %c0_i32_0 = arith.constant 0 : i32
    %c0_i32_1 = arith.constant 0 : i32
    return %c0_i32, %c0_i32_0 : i32, i32
  }
  func.func @transform_5(%arg0: i32) -> (i32, i32) {
    %c0_i32 = arith.constant 0 : i32
    %c0_i32_0 = arith.constant 0 : i32
    %c0_i32_1 = arith.constant 0 : i32
    return %c0_i32, %c0_i32_0 : i32, i32
  }
  func.func @transform_6(%arg0: i32) -> (i32, i32) {
    %c0_i32 = arith.constant 0 : i32
    %c0_i32_0 = arith.constant 0 : i32
    %c0_i32_1 = arith.constant 0 : i32
    return %c0_i32, %c0_i32_0 : i32, i32
  }
  func.func @transform_7(%arg0: i32) -> (i32, i32) {
    %c0_i32 = arith.constant 0 : i32
    %c0_i32_0 = arith.constant 0 : i32
    %c0_i32_1 = arith.constant 0 : i32
    return %c0_i32, %c0_i32_0 : i32, i32
  }
  func.func @transform_8(%arg0: i32) -> (i32, i32) {
    %c0_i32 = arith.constant 0 : i32
    %c0_i32_0 = arith.constant 0 : i32
    %c0_i32_1 = arith.constant 0 : i32
    return %c0_i32, %c0_i32_0 : i32, i32
  }
  func.func @transform_9(%arg0: i32) -> (i32, i32) {
    %c0_i32 = arith.constant 0 : i32
    %c0_i32_0 = arith.constant 0 : i32
    %c0_i32_1 = arith.constant 0 : i32
    return %c0_i32, %c0_i32_0 : i32, i32
  }
  func.func @transform_10(%arg0: i32) -> (i32, i32) {
    %c0_i32 = arith.constant 0 : i32
    %c0_i32_0 = arith.constant 0 : i32
    %c0_i32_1 = arith.constant 0 : i32
    return %c0_i32, %c0_i32_0 : i32, i32
  }
  func.func @transform_11(%arg0: i32) -> (i32, i32) {
    %c0_i32 = arith.constant 0 : i32
    %c0_i32_0 = arith.constant 0 : i32
    %c0_i32_1 = arith.constant 0 : i32
    return %c0_i32, %c0_i32_0 : i32, i32
  }
  func.func @transform_12(%arg0: i32) -> (i32, i32) {
    %c0_i32 = arith.constant 0 : i32
    %c0_i32_0 = arith.constant 0 : i32
    %c0_i32_1 = arith.constant 0 : i32
    return %c0_i32, %c0_i32_0 : i32, i32
  }
  func.func @transform_13(%arg0: i32) -> (i32, i32) {
    %c0_i32 = arith.constant 0 : i32
    %c0_i32_0 = arith.constant 0 : i32
    %c0_i32_1 = arith.constant 0 : i32
    return %c0_i32, %c0_i32_0 : i32, i32
  }
  func.func @transform_14(%arg0: i32) -> (i32, i32) {
    %c0_i32 = arith.constant 0 : i32
    %c0_i32_0 = arith.constant 0 : i32
    %c0_i32_1 = arith.constant 0 : i32
    return %c0_i32, %c0_i32_0 : i32, i32
  }
  func.func @transform_15(%arg0: i32) -> (i32, i32) {
    %c0_i32 = arith.constant 0 : i32
    %c0_i32_0 = arith.constant 0 : i32
    %c0_i32_1 = arith.constant 0 : i32
    return %c0_i32, %c0_i32_0 : i32, i32
  }
  func.func @transform_16(%arg0: i32) -> (i32, i32) {
    %c0_i32 = arith.constant 0 : i32
    %c0_i32_0 = arith.constant 0 : i32
    %c0_i32_1 = arith.constant 0 : i32
    return %c0_i32, %c0_i32_0 : i32, i32
  }
  func.func @transform_17(%arg0: i32) -> (i32, i32) {
    %c0_i32 = arith.constant 0 : i32
    %c0_i32_0 = arith.constant 0 : i32
    %c0_i32_1 = arith.constant 0 : i32
    return %c0_i32, %c0_i32_0 : i32, i32
  }
  func.func @transform_18(%arg0: i32) -> (i32, i32) {
    %c0_i32 = arith.constant 0 : i32
    %c0_i32_0 = arith.constant 0 : i32
    %c0_i32_1 = arith.constant 0 : i32
    return %c0_i32, %c0_i32_0 : i32, i32
  }
  func.func @transform_19(%arg0: i32) -> (i32, i32, i32) {
    %c0_i32 = arith.constant 0 : i32
    %c0_i32_0 = arith.constant 0 : i32
    %c0_i32_1 = arith.constant 0 : i32
    return %arg0, %c0_i32, %c0_i32_0 : i32, i32, i32
  }
}

</mosaic_0001>

<llo_original>
// kernel: transformer_block.1
$region0: #{transformer_block.1}
  #allocation0 [shape = 'u32[]', space=smem, size = 0x4, offset = 0x4, fixed_abs, tag = 'smem constant byte address 0x4 - core index']
  #allocation1 [shape = 'u32[144,128]{1,0:T(1,128)}', space=vmem, size = 0x12000, scoped, tag = 'internal scratch']
  %s0 = inlined_call_operand.vmem [shape: f32[2,8,32], index: 0, kind: input, shape index: {}]
  %s1 = inlined_call_operand.vmem [shape: f32[8,8], index: 1, kind: input, shape index: {}]
  %s2 = inlined_call_operand.vmem [shape: bf16[4,32], index: 2, kind: input, shape index: {}]
  %s3 = inlined_call_operand.vmem [shape: f32[1,32], index: 3, kind: input, shape index: {}]
  %s4 = inlined_call_operand.vmem [shape: f32[1,32], index: 4, kind: input, shape index: {}]
  %s5 = inlined_call_operand.vmem [shape: bf16[32,32], index: 5, kind: input, shape index: {}]
  %s6 = inlined_call_operand.vmem [shape: f32[1,32], index: 6, kind: input, shape index: {}]
  %s7 = inlined_call_operand.vmem [shape: bf16[32,32], index: 7, kind: input, shape index: {}]
  %s8 = inlined_call_operand.vmem [shape: f32[1,32], index: 8, kind: input, shape index: {}]
  %s9 = inlined_call_operand.vmem [shape: bf16[32,32], index: 9, kind: input, shape index: {}]
  %s10 = inlined_call_operand.vmem [shape: f32[1,32], index: 10, kind: input, shape index: {}]
  %s11 = inlined_call_operand.vmem [shape: bf16[32,32], index: 11, kind: input, shape index: {}]
  %s12 = inlined_call_operand.vmem [shape: f32[1,32], index: 12, kind: input, shape index: {}]
  %s13 = inlined_call_operand.vmem [shape: f32[1,32], index: 13, kind: input, shape index: {}]
  %s14 = inlined_call_operand.vmem [shape: f32[1,32], index: 14, kind: input, shape index: {}]
  %s15 = inlined_call_operand.vmem [shape: bf16[32,128], index: 15, kind: input, shape index: {}]
  %s16 = inlined_call_operand.vmem [shape: f32[1,128], index: 16, kind: input, shape index: {}]
  %s17 = inlined_call_operand.vmem [shape: bf16[128,32], index: 17, kind: input, shape index: {}]
  %s18 = inlined_call_operand.vmem [shape: f32[1,32], index: 18, kind: input, shape index: {}]
  %s19 = inlined_call_operand.hbm [shape: f32[2,8,32], index: 19, kind: output, shape index: {}]
  %s20 = sld [smem:[#allocation0]]
  $region109: #{transformer_block.1} parent=0
    _
  %s22 = ssub.s32 1, %s20
  %s23 = scalar_select 0, %s22, %s20
  $region1: #{transformer_block.1} parent=0
    #allocation2 [shape = 'u8[8192]{0}', space=vmem, size = 0x2000, scoped, tag = 'output window, operand 0']
    #allocation3 [shape = 's32[2]{0}', space=sflag, size = 0x8, scoped, tag = 'scoped memory for transformer_block.1']
    %24 = vsyncpa [#allocation3], 0
    %s25 = scalar_lea.sflag [#allocation3], 1
    %26 = vsyncpa %s25, 0
    loop: start=0, step=1, limit=4
    $region2: #{transformer_block.1} parent=1 // loop_pre_header
      _
    $region3: #{transformer_block.1} parent=1 // loop_header
      %s28 = sphi 0, %s32
      %p29 = scmp.ge.s32.totalorder %s28, 4
      %s38 = sphi 0, %s40
      %s41 = sphi 0, %s38
      %s42 = sphi 0, %s41
      %s58 = sphi 0, %s42
      %s62 = sphi 0, %s62
      %s64 = sphi 0, %s62
      %s65 = sphi 0, %s64
      %s79 = sphi 0, %s65
      %s83 = sphi 0, %s83
      %s85 = sphi 0, %s83
      %s86 = sphi 0, %s85
      %s100 = sphi 0, %s86
      %s104 = sphi 0, %s104
      %s106 = sphi 0, %s104
      %s107 = sphi 0, %s106
      %s121 = sphi 0, %s107
      %s125 = sphi 0, %s125
      %s127 = sphi 0, %s125
      %s128 = sphi 0, %s127
      %s142 = sphi 0, %s128
      %s146 = sphi 0, %s146
      %s148 = sphi 0, %s146
      %s149 = sphi 0, %s148
      %s163 = sphi 0, %s149
      %s167 = sphi 0, %s167
      %s169 = sphi 0, %s167
      %s170 = sphi 0, %s169
      %s184 = sphi 0, %s170
      %s188 = sphi 0, %s188
      %s190 = sphi 0, %s188
      %s191 = sphi 0, %s190
      %s205 = sphi 0, %s191
      %s209 = sphi 0, %s209
      %s211 = sphi 0, %s209
      %s212 = sphi 0, %s211
      %s226 = sphi 0, %s212
      %s230 = sphi 0, %s230
      %s232 = sphi 0, %s230
      %s233 = sphi 0, %s232
      %s247 = sphi 0, %s233
      %s251 = sphi 0, %s251
      %s253 = sphi 0, %s251
      %s254 = sphi 0, %s253
      %s268 = sphi 0, %s254
      %s272 = sphi 0, %s272
      %s274 = sphi 0, %s272
      %s275 = sphi 0, %s274
      %s289 = sphi 0, %s275
      %s293 = sphi 0, %s293
      %s295 = sphi 0, %s293
      %s296 = sphi 0, %s295
      %s310 = sphi 0, %s296
      %s314 = sphi 0, %s314
      %s316 = sphi 0, %s314
      %s317 = sphi 0, %s316
      %s331 = sphi 0, %s317
      %s335 = sphi 0, %s335
      %s337 = sphi 0, %s335
      %s338 = sphi 0, %s337
      %s352 = sphi 0, %s338
      %s356 = sphi 0, %s356
      %s358 = sphi 0, %s356
      %s359 = sphi 0, %s358
      %s373 = sphi 0, %s359
      %s377 = sphi 0, %s377
      %s379 = sphi 0, %s377
      %s380 = sphi 0, %s379
      %s394 = sphi 0, %s380
      %s398 = sphi 0, %s398
      %s400 = sphi 0, %s398
      %s401 = sphi 0, %s400
      %s415 = sphi 0, %s401
      %s419 = sphi 0, %s419
      %s421 = sphi 0, %s419
      %s422 = sphi 0, %s421
      %s436 = sphi 0, %s422
      %s442 = sphi 0, %s444
      %s445 = sphi 0, %s442
      %s446 = sphi 0, %s445
      %s462 = sphi 0, %s446
    $region4: #{transformer_block.1} parent=1 // loop_header_branch
      %31 = sbr.rel (%p29) target = $region8
    $region5: #{transformer_block.1} parent=1 // loop_body
      %s33 = ssub.s32 %s28, 1
      %s34 = ssub.s32 %s28, 2
      %s35 = sadd.s32 %s28, 1
      %s36 = ssub.s32 %s28, %s35
      %p37 = scmp.eq.s32.totalorder %s36, 0
      %s39 = sadd.s32 %s38, 1
      %s40 = scalar_select %p37, %s38, %s39
      %p43 = pneg %p37
      %p44 = scmp.eq.s32.totalorder %s28, 1
      %p45 = por %p43, %p44
      %p46 = scmp.ne.s32.totalorder %s38, %s41
      %p47 = scmp.eq.s32.totalorder %s28, 0
      %p48 = por %p46, %p47
      %p49 = scmp.ne.s32.totalorder %s38, %s41
      %p50 = scmp.eq.s32.totalorder %s33, 1
      %p51 = por %p49, %p50
      %p52 = scmp.ne.s32.totalorder %s41, %s42
      %p53 = scmp.eq.s32.totalorder %s33, 0
      %p54 = por %p52, %p53
      %p55 = scmp.ne.s32.totalorder %s41, %s42
      %p56 = scmp.eq.s32.totalorder %s34, 1
      %p57 = por %p55, %p56
      %p59 = scmp.ne.s32.totalorder %s42, %s58
      %p60 = scmp.eq.s32.totalorder %s34, 0
      %p61 = por %p59, %p60
      %s63 = sadd.s32 %s62, 1
      %p66 = scmp.eq.s32.totalorder %s28, 1
      %p67 = scmp.ne.s32.totalorder %s62, %s64
      %p68 = scmp.eq.s32.totalorder %s28, 0
      %p69 = por %p67, %p68
      %p70 = scmp.ne.s32.totalorder %s62, %s64
      %p71 = scmp.eq.s32.totalorder %s33, 1
      %p72 = por %p70, %p71
      %p73 = scmp.ne.s32.totalorder %s64, %s65
      %p74 = scmp.eq.s32.totalorder %s33, 0
      %p75 = por %p73, %p74
      %p76 = scmp.ne.s32.totalorder %s64, %s65
      %p77 = scmp.eq.s32.totalorder %s34, 1
      %p78 = por %p76, %p77
      %p80 = scmp.ne.s32.totalorder %s65, %s79
      %p81 = scmp.eq.s32.totalorder %s34, 0
      %p82 = por %p80, %p81
      %s84 = sadd.s32 %s83, 1
      %p87 = scmp.eq.s32.totalorder %s28, 1
      %p88 = scmp.ne.s32.totalorder %s83, %s85
      %p89 = scmp.eq.s32.totalorder %s28, 0
      %p90 = por %p88, %p89
      %p91 = scmp.ne.s32.totalorder %s83, %s85
      %p92 = scmp.eq.s32.totalorder %s33, 1
      %p93 = por %p91, %p92
      %p94 = scmp.ne.s32.totalorder %s85, %s86
      %p95 = scmp.eq.s32.totalorder %s33, 0
      %p96 = por %p94, %p95
      %p97 = scmp.ne.s32.totalorder %s85, %s86
      %p98 = scmp.eq.s32.totalorder %s34, 1
      %p99 = por %p97, %p98
      %p101 = scmp.ne.s32.totalorder %s86, %s100
      %p102 = scmp.eq.s32.totalorder %s34, 0
      %p103 = por %p101, %p102
      %s105 = sadd.s32 %s104, 1
      %p108 = scmp.eq.s32.totalorder %s28, 1
      %p109 = scmp.ne.s32.totalorder %s104, %s106
      %p110 = scmp.eq.s32.totalorder %s28, 0
      %p111 = por %p109, %p110
      %p112 = scmp.ne.s32.totalorder %s104, %s106
      %p113 = scmp.eq.s32.totalorder %s33, 1
      %p114 = por %p112, %p113
      %p115 = scmp.ne.s32.totalorder %s106, %s107
      %p116 = scmp.eq.s32.totalorder %s33, 0
      %p117 = por %p115, %p116
      %p118 = scmp.ne.s32.totalorder %s106, %s107
      %p119 = scmp.eq.s32.totalorder %s34, 1
      %p120 = por %p118, %p119
      %p122 = scmp.ne.s32.totalorder %s107, %s121
      %p123 = scmp.eq.s32.totalorder %s34, 0
      %p124 = por %p122, %p123
      %s126 = sadd.s32 %s125, 1
      %p129 = scmp.eq.s32.totalorder %s28, 1
      %p130 = scmp.ne.s32.totalorder %s125, %s127
      %p131 = scmp.eq.s32.totalorder %s28, 0
      %p132 = por %p130, %p131
      %p133 = scmp.ne.s32.totalorder %s125, %s127
      %p134 = scmp.eq.s32.totalorder %s33, 1
      %p135 = por %p133, %p134
      %p136 = scmp.ne.s32.totalorder %s127, %s128
      %p137 = scmp.eq.s32.totalorder %s33, 0
      %p138 = por %p136, %p137
      %p139 = scmp.ne.s32.totalorder %s127, %s128
      %p140 = scmp.eq.s32.totalorder %s34, 1
      %p141 = por %p139, %p140
      %p143 = scmp.ne.s32.totalorder %s128, %s142
      %p144 = scmp.eq.s32.totalorder %s34, 0
      %p145 = por %p143, %p144
      %s147 = sadd.s32 %s146, 1
      %p150 = scmp.eq.s32.totalorder %s28, 1
      %p151 = scmp.ne.s32.totalorder %s146, %s148
      %p152 = scmp.eq.s32.totalorder %s28, 0
      %p153 = por %p151, %p152
      %p154 = scmp.ne.s32.totalorder %s146, %s148
      %p155 = scmp.eq.s32.totalorder %s33, 1
      %p156 = por %p154, %p155
      %p157 = scmp.ne.s32.totalorder %s148, %s149
      %p158 = scmp.eq.s32.totalorder %s33, 0
      %p159 = por %p157, %p158
      %p160 = scmp.ne.s32.totalorder %s148, %s149
      %p161 = scmp.eq.s32.totalorder %s34, 1
      %p162 = por %p160, %p161
      %p164 = scmp.ne.s32.totalorder %s149, %s163
      %p165 = scmp.eq.s32.totalorder %s34, 0
      %p166 = por %p164, %p165
      %s168 = sadd.s32 %s167, 1
      %p171 = scmp.eq.s32.totalorder %s28, 1
      %p172 = scmp.ne.s32.totalorder %s167, %s169
      %p173 = scmp.eq.s32.totalorder %s28, 0
      %p174 = por %p172, %p173
      %p175 = scmp.ne.s32.totalorder %s167, %s169
      %p176 = scmp.eq.s32.totalorder %s33, 1
      %p177 = por %p175, %p176
      %p178 = scmp.ne.s32.totalorder %s169, %s170
      %p179 = scmp.eq.s32.totalorder %s33, 0
      %p180 = por %p178, %p179
      %p181 = scmp.ne.s32.totalorder %s169, %s170
      %p182 = scmp.eq.s32.totalorder %s34, 1
      %p183 = por %p181, %p182
      %p185 = scmp.ne.s32.totalorder %s170, %s184
      %p186 = scmp.eq.s32.totalorder %s34, 0
      %p187 = por %p185, %p186
      %s189 = sadd.s32 %s188, 1
      %p192 = scmp.eq.s32.totalorder %s28, 1
      %p193 = scmp.ne.s32.totalorder %s188, %s190
      %p194 = scmp.eq.s32.totalorder %s28, 0
      %p195 = por %p193, %p194
      %p196 = scmp.ne.s32.totalorder %s188, %s190
      %p197 = scmp.eq.s32.totalorder %s33, 1
      %p198 = por %p196, %p197
      %p199 = scmp.ne.s32.totalorder %s190, %s191
      %p200 = scmp.eq.s32.totalorder %s33, 0
      %p201 = por %p199, %p200
      %p202 = scmp.ne.s32.totalorder %s190, %s191
      %p203 = scmp.eq.s32.totalorder %s34, 1
      %p204 = por %p202, %p203
      %p206 = scmp.ne.s32.totalorder %s191, %s205
      %p207 = scmp.eq.s32.totalorder %s34, 0
      %p208 = por %p206, %p207
      %s210 = sadd.s32 %s209, 1
      %p213 = scmp.eq.s32.totalorder %s28, 1
      %p214 = scmp.ne.s32.totalorder %s209, %s211
      %p215 = scmp.eq.s32.totalorder %s28, 0
      %p216 = por %p214, %p215
      %p217 = scmp.ne.s32.totalorder %s209, %s211
      %p218 = scmp.eq.s32.totalorder %s33, 1
      %p219 = por %p217, %p218
      %p220 = scmp.ne.s32.totalorder %s211, %s212
      %p221 = scmp.eq.s32.totalorder %s33, 0
      %p222 = por %p220, %p221
      %p223 = scmp.ne.s32.totalorder %s211, %s212
      %p224 = scmp.eq.s32.totalorder %s34, 1
      %p225 = por %p223, %p224
      %p227 = scmp.ne.s32.totalorder %s212, %s226
      %p228 = scmp.eq.s32.totalorder %s34, 0
      %p229 = por %p227, %p228
      %s231 = sadd.s32 %s230, 1
      %p234 = scmp.eq.s32.totalorder %s28, 1
      %p235 = scmp.ne.s32.totalorder %s230, %s232
      %p236 = scmp.eq.s32.totalorder %s28, 0
      %p237 = por %p235, %p236
      %p238 = scmp.ne.s32.totalorder %s230, %s232
      %p239 = scmp.eq.s32.totalorder %s33, 1
      %p240 = por %p238, %p239
      %p241 = scmp.ne.s32.totalorder %s232, %s233
      %p242 = scmp.eq.s32.totalorder %s33, 0
      %p243 = por %p241, %p242
      %p244 = scmp.ne.s32.totalorder %s232, %s233
      %p245 = scmp.eq.s32.totalorder %s34, 1
      %p246 = por %p244, %p245
      %p248 = scmp.ne.s32.totalorder %s233, %s247
      %p249 = scmp.eq.s32.totalorder %s34, 0
      %p250 = por %p248, %p249
      %s252 = sadd.s32 %s251, 1
      %p255 = scmp.eq.s32.totalorder %s28, 1
      %p256 = scmp.ne.s32.totalorder %s251, %s253
      %p257 = scmp.eq.s32.totalorder %s28, 0
      %p258 = por %p256, %p257
      %p259 = scmp.ne.s32.totalorder %s251, %s253
      %p260 = scmp.eq.s32.totalorder %s33, 1
      %p261 = por %p259, %p260
      %p262 = scmp.ne.s32.totalorder %s253, %s254
      %p263 = scmp.eq.s32.totalorder %s33, 0
      %p264 = por %p262, %p263
      %p265 = scmp.ne.s32.totalorder %s253, %s254
      %p266 = scmp.eq.s32.totalorder %s34, 1
      %p267 = por %p265, %p266
      %p269 = scmp.ne.s32.totalorder %s254, %s268
      %p270 = scmp.eq.s32.totalorder %s34, 0
      %p271 = por %p269, %p270
      %s273 = sadd.s32 %s272, 1
      %p276 = scmp.eq.s32.totalorder %s28, 1
      %p277 = scmp.ne.s32.totalorder %s272, %s274
      %p278 = scmp.eq.s32.totalorder %s28, 0
      %p279 = por %p277, %p278
      %p280 = scmp.ne.s32.totalorder %s272, %s274
      %p281 = scmp.eq.s32.totalorder %s33, 1
      %p282 = por %p280, %p281
      %p283 = scmp.ne.s32.totalorder %s274, %s275
      %p284 = scmp.eq.s32.totalorder %s33, 0
      %p285 = por %p283, %p284
      %p286 = scmp.ne.s32.totalorder %s274, %s275
      %p287 = scmp.eq.s32.totalorder %s34, 1
      %p288 = por %p286, %p287
      %p290 = scmp.ne.s32.totalorder %s275, %s289
      %p291 = scmp.eq.s32.totalorder %s34, 0
      %p292 = por %p290, %p291
      %s294 = sadd.s32 %s293, 1
      %p297 = scmp.eq.s32.totalorder %s28, 1
      %p298 = scmp.ne.s32.totalorder %s293, %s295
      %p299 = scmp.eq.s32.totalorder %s28, 0
      %p300 = por %p298, %p299
      %p301 = scmp.ne.s32.totalorder %s293, %s295
      %p302 = scmp.eq.s32.totalorder %s33, 1
      %p303 = por %p301, %p302
      %p304 = scmp.ne.s32.totalorder %s295, %s296
      %p305 = scmp.eq.s32.totalorder %s33, 0
      %p306 = por %p304, %p305
      %p307 = scmp.ne.s32.totalorder %s295, %s296
      %p308 = scmp.eq.s32.totalorder %s34, 1
      %p309 = por %p307, %p308
      %p311 = scmp.ne.s32.totalorder %s296, %s310
      %p312 = scmp.eq.s32.totalorder %s34, 0
      %p313 = por %p311, %p312
      %s315 = sadd.s32 %s314, 1
      %p318 = scmp.eq.s32.totalorder %s28, 1
      %p319 = scmp.ne.s32.totalorder %s314, %s316
      %p320 = scmp.eq.s32.totalorder %s28, 0
      %p321 = por %p319, %p320
      %p322 = scmp.ne.s32.totalorder %s314, %s316
      %p323 = scmp.eq.s32.totalorder %s33, 1
      %p324 = por %p322, %p323
      %p325 = scmp.ne.s32.totalorder %s316, %s317
      %p326 = scmp.eq.s32.totalorder %s33, 0
      %p327 = por %p325, %p326
      %p328 = scmp.ne.s32.totalorder %s316, %s317
      %p329 = scmp.eq.s32.totalorder %s34, 1
      %p330 = por %p328, %p329
      %p332 = scmp.ne.s32.totalorder %s317, %s331
      %p333 = scmp.eq.s32.totalorder %s34, 0
      %p334 = por %p332, %p333
      %s336 = sadd.s32 %s335, 1
      %p339 = scmp.eq.s32.totalorder %s28, 1
      %p340 = scmp.ne.s32.totalorder %s335, %s337
      %p341 = scmp.eq.s32.totalorder %s28, 0
      %p342 = por %p340, %p341
      %p343 = scmp.ne.s32.totalorder %s335, %s337
      %p344 = scmp.eq.s32.totalorder %s33, 1
      %p345 = por %p343, %p344
      %p346 = scmp.ne.s32.totalorder %s337, %s338
      %p347 = scmp.eq.s32.totalorder %s33, 0
      %p348 = por %p346, %p347
      %p349 = scmp.ne.s32.totalorder %s337, %s338
      %p350 = scmp.eq.s32.totalorder %s34, 1
      %p351 = por %p349, %p350
      %p353 = scmp.ne.s32.totalorder %s338, %s352
      %p354 = scmp.eq.s32.totalorder %s34, 0
      %p355 = por %p353, %p354
      %s357 = sadd.s32 %s356, 1
      %p360 = scmp.eq.s32.totalorder %s28, 1
      %p361 = scmp.ne.s32.totalorder %s356, %s358
      %p362 = scmp.eq.s32.totalorder %s28, 0
      %p363 = por %p361, %p362
      %p364 = scmp.ne.s32.totalorder %s356, %s358
      %p365 = scmp.eq.s32.totalorder %s33, 1
      %p366 = por %p364, %p365
      %p367 = scmp.ne.s32.totalorder %s358, %s359
      %p368 = scmp.eq.s32.totalorder %s33, 0
      %p369 = por %p367, %p368
      %p370 = scmp.ne.s32.totalorder %s358, %s359
      %p371 = scmp.eq.s32.totalorder %s34, 1
      %p372 = por %p370, %p371
      %p374 = scmp.ne.s32.totalorder %s359, %s373
      %p375 = scmp.eq.s32.totalorder %s34, 0
      %p376 = por %p374, %p375
      %s378 = sadd.s32 %s377, 1
      %p381 = scmp.eq.s32.totalorder %s28, 1
      %p382 = scmp.ne.s32.totalorder %s377, %s379
      %p383 = scmp.eq.s32.totalorder %s28, 0
      %p384 = por %p382, %p383
      %p385 = scmp.ne.s32.totalorder %s377, %s379
      %p386 = scmp.eq.s32.totalorder %s33, 1
      %p387 = por %p385, %p386
      %p388 = scmp.ne.s32.totalorder %s379, %s380
      %p389 = scmp.eq.s32.totalorder %s33, 0
      %p390 = por %p388, %p389
      %p391 = scmp.ne.s32.totalorder %s379, %s380
      %p392 = scmp.eq.s32.totalorder %s34, 1
      %p393 = por %p391, %p392
      %p395 = scmp.ne.s32.totalorder %s380, %s394
      %p396 = scmp.eq.s32.totalorder %s34, 0
      %p397 = por %p395, %p396
      %s399 = sadd.s32 %s398, 1
      %p402 = scmp.eq.s32.totalorder %s28, 1
      %p403 = scmp.ne.s32.totalorder %s398, %s400
      %p404 = scmp.eq.s32.totalorder %s28, 0
      %p405 = por %p403, %p404
      %p406 = scmp.ne.s32.totalorder %s398, %s400
      %p407 = scmp.eq.s32.totalorder %s33, 1
      %p408 = por %p406, %p407
      %p409 = scmp.ne.s32.totalorder %s400, %s401
      %p410 = scmp.eq.s32.totalorder %s33, 0
      %p411 = por %p409, %p410
      %p412 = scmp.ne.s32.totalorder %s400, %s401
      %p413 = scmp.eq.s32.totalorder %s34, 1
      %p414 = por %p412, %p413
      %p416 = scmp.ne.s32.totalorder %s401, %s415
      %p417 = scmp.eq.s32.totalorder %s34, 0
      %p418 = por %p416, %p417
      %s420 = sadd.s32 %s419, 1
      %p423 = scmp.eq.s32.totalorder %s28, 1
      %p424 = scmp.ne.s32.totalorder %s419, %s421
      %p425 = scmp.eq.s32.totalorder %s28, 0
      %p426 = por %p424, %p425
      %p427 = scmp.ne.s32.totalorder %s419, %s421
      %p428 = scmp.eq.s32.totalorder %s33, 1
      %p429 = por %p427, %p428
      %p430 = scmp.ne.s32.totalorder %s421, %s422
      %p431 = scmp.eq.s32.totalorder %s33, 0
      %p432 = por %p430, %p431
      %p433 = scmp.ne.s32.totalorder %s421, %s422
      %p434 = scmp.eq.s32.totalorder %s34, 1
      %p435 = por %p433, %p434
      %p437 = scmp.ne.s32.totalorder %s422, %s436
      %p438 = scmp.eq.s32.totalorder %s34, 0
      %p439 = por %p437, %p438
      %s440 = ssub.s32 %s28, %s35
      %p441 = scmp.eq.s32.totalorder %s440, 0
      %s443 = sadd.s32 %s442, 1
      %s444 = scalar_select %p441, %s442, %s443
      %p447 = pneg %p441
      %p448 = scmp.eq.s32.totalorder %s28, 1
      %p449 = por %p447, %p448
      %p450 = scmp.ne.s32.totalorder %s442, %s445
      %p451 = scmp.eq.s32.totalorder %s28, 0
      %p452 = por %p450, %p451
      %p453 = scmp.ne.s32.totalorder %s442, %s445
      %p454 = scmp.eq.s32.totalorder %s33, 1
      %p455 = por %p453, %p454
      %p456 = scmp.ne.s32.totalorder %s445, %s446
      %p457 = scmp.eq.s32.totalorder %s33, 0
      %p458 = por %p456, %p457
      %p459 = scmp.ne.s32.totalorder %s445, %s446
      %p460 = scmp.eq.s32.totalorder %s34, 1
      %p461 = por %p459, %p460
      %p463 = scmp.ne.s32.totalorder %s446, %s462
      %p464 = scmp.eq.s32.totalorder %s34, 0
      %p465 = por %p463, %p464
      %p466 = scmp.le.s32.totalorder 1, %s28
      %p467 = scmp.lt.s32.totalorder %s28, 3
      %p468 = pnand %p466, %p467
      %p469 = pneg %p468
      // Predicated region
      $region9: #{transformer_block.1} parent=5 // pred_check
        _
      $region10: #{transformer_block.1} parent=5 // pred_check_branch
        %471 = sbr.rel (%p468) target = $region12
      $region11: #{transformer_block.1} parent=5 // pred_region
        %s472 = ssub.s32 %s28, 1
        // Predicated region
        $region13: #{transformer_block.1} parent=11 // pred_check
          %p473 = pneg %p75
        $region14: #{transformer_block.1} parent=11 // pred_check_branch
          %475 = sbr.rel (%p473) target = $region16
        $region15: #{transformer_block.1} parent=11 // pred_region
          _
        $region16: #{transformer_block.1} parent=11 // pred_fallthru
          _
        // Predicated region
        $region17: #{transformer_block.1} parent=11 // pred_check
          %p476 = pneg %p96
        $region18: #{transformer_block.1} parent=11 // pred_check_branch
          %478 = sbr.rel (%p476) target = $region20
        $region19: #{transformer_block.1} parent=11 // pred_region
          _
        $region20: #{transformer_block.1} parent=11 // pred_fallthru
          _
        // Predicated region
        $region21: #{transformer_block.1} parent=11 // pred_check
          %p479 = pneg %p117
        $region22: #{transformer_block.1} parent=11 // pred_check_branch
          %481 = sbr.rel (%p479) target = $region24
        $region23: #{transformer_block.1} parent=11 // pred_region
          _
        $region24: #{transformer_block.1} parent=11 // pred_fallthru
          _
        // Predicated region
        $region25: #{transformer_block.1} parent=11 // pred_check
          %p482 = pneg %p138
        $region26: #{transformer_block.1} parent=11 // pred_check_branch
          %484 = sbr.rel (%p482) target = $region28
        $region27: #{transformer_block.1} parent=11 // pred_region
          _
        $region28: #{transformer_block.1} parent=11 // pred_fallthru
          _
        // Predicated region
        $region29: #{transformer_block.1} parent=11 // pred_check
          %p485 = pneg %p159
        $region30: #{transformer_block.1} parent=11 // pred_check_branch
          %487 = sbr.rel (%p485) target = $region32
        $region31: #{transformer_block.1} parent=11 // pred_region
          _
        $region32: #{transformer_block.1} parent=11 // pred_fallthru
          _
        // Predicated region
        $region33: #{transformer_block.1} parent=11 // pred_check
          %p488 = pneg %p180
        $region34: #{transformer_block.1} parent=11 // pred_check_branch
          %490 = sbr.rel (%p488) target = $region36
        $region35: #{transformer_block.1} parent=11 // pred_region
          _
        $region36: #{transformer_block.1} parent=11 // pred_fallthru
          _
        // Predicated region
        $region37: #{transformer_block.1} parent=11 // pred_check
          %p491 = pneg %p201
        $region38: #{transformer_block.1} parent=11 // pred_check_branch
          %493 = sbr.rel (%p491) target = $region40
        $region39: #{transformer_block.1} parent=11 // pred_region
          _
        $region40: #{transformer_block.1} parent=11 // pred_fallthru
          _
        // Predicated region
        $region41: #{transformer_block.1} parent=11 // pred_check
          %p494 = pneg %p222
        $region42: #{transformer_block.1} parent=11 // pred_check_branch
          %496 = sbr.rel (%p494) target = $region44
        $region43: #{transformer_block.1} parent=11 // pred_region
          _
        $region44: #{transformer_block.1} parent=11 // pred_fallthru
          _
        // Predicated region
        $region45: #{transformer_block.1} parent=11 // pred_check
          %p497 = pneg %p243
        $region46: #{transformer_block.1} parent=11 // pred_check_branch
          %499 = sbr.rel (%p497) target = $region48
        $region47: #{transformer_block.1} parent=11 // pred_region
          _
        $region48: #{transformer_block.1} parent=11 // pred_fallthru
          _
        // Predicated region
        $region49: #{transformer_block.1} parent=11 // pred_check
          %p500 = pneg %p264
        $region50: #{transformer_block.1} parent=11 // pred_check_branch
          %502 = sbr.rel (%p500) target = $region52
        $region51: #{transformer_block.1} parent=11 // pred_region
          _
        $region52: #{transformer_block.1} parent=11 // pred_fallthru
          _
        // Predicated region
        $region53: #{transformer_block.1} parent=11 // pred_check
          %p503 = pneg %p285
        $region54: #{transformer_block.1} parent=11 // pred_check_branch
          %505 = sbr.rel (%p503) target = $region56
        $region55: #{transformer_block.1} parent=11 // pred_region
          _
        $region56: #{transformer_block.1} parent=11 // pred_fallthru
          _
        // Predicated region
        $region57: #{transformer_block.1} parent=11 // pred_check
          %p506 = pneg %p306
        $region58: #{transformer_block.1} parent=11 // pred_check_branch
          %508 = sbr.rel (%p506) target = $region60
        $region59: #{transformer_block.1} parent=11 // pred_region
          _
        $region60: #{transformer_block.1} parent=11 // pred_fallthru
          _
        // Predicated region
        $region61: #{transformer_block.1} parent=11 // pred_check
          %p509 = pneg %p327
        $region62: #{transformer_block.1} parent=11 // pred_check_branch
          %511 = sbr.rel (%p509) target = $region64
        $region63: #{transformer_block.1} parent=11 // pred_region
          _
        $region64: #{transformer_block.1} parent=11 // pred_fallthru
          _
        // Predicated region
        $region65: #{transformer_block.1} parent=11 // pred_check
          %p512 = pneg %p348
        $region66: #{transformer_block.1} parent=11 // pred_check_branch
          %514 = sbr.rel (%p512) target = $region68
        $region67: #{transformer_block.1} parent=11 // pred_region
          _
        $region68: #{transformer_block.1} parent=11 // pred_fallthru
          _
        // Predicated region
        $region69: #{transformer_block.1} parent=11 // pred_check
          %p515 = pneg %p369
        $region70: #{transformer_block.1} parent=11 // pred_check_branch
          %517 = sbr.rel (%p515) target = $region72
        $region71: #{transformer_block.1} parent=11 // pred_region
          _
        $region72: #{transformer_block.1} parent=11 // pred_fallthru
          _
        // Predicated region
        $region73: #{transformer_block.1} parent=11 // pred_check
          %p518 = pneg %p390
        $region74: #{transformer_block.1} parent=11 // pred_check_branch
          %520 = sbr.rel (%p518) target = $region76
        $region75: #{transformer_block.1} parent=11 // pred_region
          _
        $region76: #{transformer_block.1} parent=11 // pred_fallthru
          _
        // Predicated region
        $region77: #{transformer_block.1} parent=11 // pred_check
          %p521 = pneg %p411
        $region78: #{transformer_block.1} parent=11 // pred_check_branch
          %523 = sbr.rel (%p521) target = $region80
        $region79: #{transformer_block.1} parent=11 // pred_region
          _
        $region80: #{transformer_block.1} parent=11 // pred_fallthru
          _
        // Predicated region
        $region81: #{transformer_block.1} parent=11 // pred_check
          %p524 = pneg %p432
        $region82: #{transformer_block.1} parent=11 // pred_check_branch
          %526 = sbr.rel (%p524) target = $region84
        $region83: #{transformer_block.1} parent=11 // pred_region
          _
        $region84: #{transformer_block.1} parent=11 // pred_fallthru
          _
      $region12: #{transformer_block.1} parent=5 // pred_fallthru
        _
      %p527 = scmp.lt.s32.totalorder %s28, 2
      // Predicated region
      $region85: #{transformer_block.1} parent=5 // pred_check
        %p528 = pneg %p527
      $region86: #{transformer_block.1} parent=5 // pred_check_branch
        %530 = sbr.rel (%p528) target = $region88
      $region87: #{transformer_block.1} parent=5 // pred_region
        // Predicated region
        $region89: #{transformer_block.1} parent=87 // pred_check
          %p531 = pneg %p48
        $region90: #{transformer_block.1} parent=87 // pred_check_branch
          %533 = sbr.rel (%p531) target = $region92
        $region91: #{transformer_block.1} parent=87 // pred_region
          %p534 = scmp.lt.s32.totalorder %s28, 1
          %s535 = scalar_select %p534, %s28, 1
          %s536 = smul.addr %s535, 8
          %s537 = scalar_lea.vmem %s0, %s536
        $region92: #{transformer_block.1} parent=87 // pred_fallthru
          _
      $region88: #{transformer_block.1} parent=5 // pred_fallthru
        _
      %p538 = scmp.le.s32.totalorder 1, %s28
      %p539 = scmp.lt.s32.totalorder %s28, 3
      %p540 = pnand %p538, %p539
      %p541 = pneg %p540
      // Predicated region
      $region93: #{transformer_block.1} parent=5 // pred_check
        _
      $region94: #{transformer_block.1} parent=5 // pred_check_branch
        %543 = sbr.rel (%p540) target = $region96
      $region95: #{transformer_block.1} parent=5 // pred_region
        %s544 = ssub.s32 %s28, 1
        %p545 = scmp.lt.s32.totalorder %s33, 1
        %s546 = scalar_select %p545, %s33, 1
        %s547 = smul.addr %s546, 8
        %s548 = scalar_lea.vmem %s0, %s547
        %p549 = pneg %p54
        %p550 = pneg %p51
        %p551 = pneg %p75
        %p552 = pneg %p72
        %p553 = pneg %p96
        %p554 = pneg %p93
        %p555 = pneg %p117
        %p556 = pneg %p114
        %p557 = pneg %p138
        %p558 = pneg %p135
        %p559 = pneg %p159
        %p560 = pneg %p156
        %p561 = pneg %p180
        %p562 = pneg %p177
        %p563 = pneg %p201
        %p564 = pneg %p198
        %p565 = pneg %p222
        %p566 = pneg %p219
        %p567 = pneg %p243
        %p568 = pneg %p240
        %p569 = pneg %p264
        %p570 = pneg %p261
        %p571 = pneg %p285
        %p572 = pneg %p282
        %p573 = pneg %p306
        %p574 = pneg %p303
        %p575 = pneg %p327
        %p576 = pneg %p324
        %p577 = pneg %p348
        %p578 = pneg %p345
        %p579 = pneg %p369
        %p580 = pneg %p366
        %p581 = pneg %p390
        %p582 = pneg %p387
        %p583 = pneg %p411
        %p584 = pneg %p408
        %p585 = pneg %p432
        %p586 = pneg %p429
        %p587 = pneg %p458
        %p588 = pneg %p455
        %s589 = sand.u32 %s445, 1
        %s590 = scalar_lea.sflag [#allocation3], %s589
        %s591 = sand.u32 %s445, 1
        %s592 = smul.addr %s591, 8
        %s593 = scalar_lea.vmem [#allocation2], %s592
        %p594 = scmp.lt.s32.totalorder %s33, 1
        %s595 = scalar_select %p594, %s33, 1
        %s596 = smul.addr %s595, 8
        %s597 = scalar_lea.vmem %s0, %s596
        %v599 = vld [vmem:[%s597] sm:$0xff]
        %v600 = vld [vmem:[%s3] sm:$0x1]
        %v601 = vld [vmem:[%s4] sm:$0x1]
        %vm602 = vcmask 261120
        %v603 = vsel %vm602, %v599, 0.0
        %604 = vadd.xlane.f32.xlu0 %v603
        %v605 = vpop.xlane.xlu0 %604
        %v606 = vrcp.pop 32.0
        %v607 = vmul.f32 %v605, %v606
        %v608 = vsub.f32 %v599, %v607
        %v609 = vmul.f32 %v608, %v608
        %v610 = vsel %vm602, %v609, 0.0
        %611 = vadd.xlane.f32.xlu0 %v610
        %v612 = vpop.xlane.xlu0 %611
        %v613 = vmul.f32 %v612, %v606
        %v614 = vadd.f32 %v613, 1e-05
        %v615 = vrsqrt.pop %v614
        %v616 = vmul.f32 %v608, %v615
        %v618 = vlaneseq
        %v619 = vshrl.u32 %v618, 7
        %v620 = vsub.s32 0, %v619
        %v621 = vrot.slane %v600, %v620
        %v623 = vmul.f32 %v616, %v621
        %v625 = vlaneseq
        %v626 = vshrl.u32 %v625, 7
        %v627 = vsub.s32 0, %v626
        %v628 = vrot.slane %v601, %v627
        %v630 = vadd.f32 %v623, %v628
        %v631 = vpack.c.bf16 %v630, %v630
        %v632 = vld [vmem:[%s5] sm:$0xf]
        %v633 = vld [vmem:[%s5 + $0x4] sm:$0xf]
        %v634 = vld [vmem:[%s5 + $0x8] sm:$0xf]
        %v635 = vld [vmem:[%s5 + $0xc] sm:$0xf]
        %v636 = vld [vmem:[%s6] sm:$0x1]
        %v638 = vlaneseq
        %v639 = vshrl.u32 %v638, 7
        %v640 = vsub.s32 0, %v639
        %v641 = vrot.slane %v636, %v640
        %v647 = vunpack.c.l.b16 %v632
        %v648 = vunpack.c.l.b16 %v633
        %v649 = vunpack.c.l.b16 %v634
        %v650 = vunpack.c.l.b16 %v635
        %v651 = vpack.c.b16 %v648, %v647
        %v652 = vpack.c.b16 %v650, %v649
        %v656 = vsel %vm602, %v631, 0
        %658 = vmatprep.subr.bf16.mxu0 0
        %659 = vmatpush1.bf16.msra.mxu0 %v651
        %660 = vmatprep.subr.bf16.mxu0 0
        %661 = vmatpush1.bf16.msra.mxu0 %v652
        %662 = vmatprep.subr.bf16.mxu0 0
        %663 = vmatpush1.bf16.msra.mxu0 0
        %664 = vmatprep.subr.bf16.mxu0 0
        %665 = vmatpush1.bf16.msra.mxu0 0
        %666 = vmatprep.subr.bf16.mxu0 0
        %667 = vmatpush1.bf16.msra.mxu0 0
        %668 = vmatprep.subr.bf16.mxu0 0
        %669 = vmatpush1.bf16.msra.mxu0 0
        %670 = vmatprep.subr.bf16.mxu0 0
        %671 = vmatpush1.bf16.msra.mxu0 0
        %672 = vmatprep.subr.bf16.mxu0 0
        %673 = vmatpush1.bf16.msra.mxu0 0
        %674 = vmatprep.subr.bf16.mxu0 0
        %675 = vmatpush1.bf16.msra.mxu0 0
        %676 = vmatprep.subr.bf16.mxu0 0
        %677 = vmatpush1.bf16.msra.mxu0 0
        %678 = vmatprep.subr.bf16.mxu0 0
        %679 = vmatpush1.bf16.msra.mxu0 0
        %680 = vmatprep.subr.bf16.mxu0 0
        %681 = vmatpush1.bf16.msra.mxu0 0
        %682 = vmatprep.subr.bf16.mxu0 0
        %683 = vmatpush1.bf16.msra.mxu0 0
        %684 = vmatprep.subr.bf16.mxu0 0
        %685 = vmatpush1.bf16.msra.mxu0 0
        %686 = vmatprep.subr.bf16.mxu0 0
        %687 = vmatpush1.bf16.msra.mxu0 0
        %688 = vmatprep.subr.bf16.mxu0 0
        %689 = vmatpush1.bf16.msra.mxu0 0
        %690 = vmatprep.mubr.bf16.mxu0 0
        %691 = vmatmul.mubr.bf16.gmra.mrb[0].mxu0 %v656
        %v692 = vpop.f32.mrb[0].mxu0
        %v693 = vadd.f32 %v641, %v692
        %v694 = vpop.f32.mrb[0].mxu0
        %v695 = vpop.f32.mrb[0].mxu0
        %v696 = vpop.f32.mrb[0].mxu0
        %697 = vdwg.mxu0
        %v698 = vpack.c.bf16 %v693, %v693
        %v699 = vld [vmem:[%s7] sm:$0xf]
        %v700 = vld [vmem:[%s7 + $0x4] sm:$0xf]
        %v701 = vld [vmem:[%s7 + $0x8] sm:$0xf]
        %v702 = vld [vmem:[%s7 + $0xc] sm:$0xf]
        %v703 = vld [vmem:[%s8] sm:$0x1]
        %v705 = vlaneseq
        %v706 = vshrl.u32 %v705, 7
        %v707 = vsub.s32 0, %v706
        %v708 = vrot.slane %v703, %v707
        %v714 = vunpack.c.l.b16 %v699
        %v715 = vunpack.c.l.b16 %v700
        %v716 = vunpack.c.l.b16 %v701
        %v717 = vunpack.c.l.b16 %v702
        %v718 = vpack.c.b16 %v715, %v714
        %v719 = vpack.c.b16 %v717, %v716
        %722 = vmatprep.subr.bf16.mxu0 0
        %723 = vmatpush1.bf16.msra.mxu0 %v718
        %724 = vmatprep.subr.bf16.mxu0 0
        %725 = vmatpush1.bf16.msra.mxu0 %v719
        %726 = vmatprep.subr.bf16.mxu0 0
        %727 = vmatpush1.bf16.msra.mxu0 0
        %728 = vmatprep.subr.bf16.mxu0 0
        %729 = vmatpush1.bf16.msra.mxu0 0
        %730 = vmatprep.subr.bf16.mxu0 0
        %731 = vmatpush1.bf16.msra.mxu0 0
        %732 = vmatprep.subr.bf16.mxu0 0
        %733 = vmatpush1.bf16.msra.mxu0 0
        %734 = vmatprep.subr.bf16.mxu0 0
        %735 = vmatpush1.bf16.msra.mxu0 0
        %736 = vmatprep.subr.bf16.mxu0 0
        %737 = vmatpush1.bf16.msra.mxu0 0
        %738 = vmatprep.subr.bf16.mxu0 0
        %739 = vmatpush1.bf16.msra.mxu0 0
        %740 = vmatprep.subr.bf16.mxu0 0
        %741 = vmatpush1.bf16.msra.mxu0 0
        %742 = vmatprep.subr.bf16.mxu0 0
        %743 = vmatpush1.bf16.msra.mxu0 0
        %744 = vmatprep.subr.bf16.mxu0 0
        %745 = vmatpush1.bf16.msra.mxu0 0
        %746 = vmatprep.subr.bf16.mxu0 0
        %747 = vmatpush1.bf16.msra.mxu0 0
        %748 = vmatprep.subr.bf16.mxu0 0
        %749 = vmatpush1.bf16.msra.mxu0 0
        %750 = vmatprep.subr.bf16.mxu0 0
        %751 = vmatpush1.bf16.msra.mxu0 0
        %752 = vmatprep.subr.bf16.mxu0 0
        %753 = vmatpush1.bf16.msra.mxu0 0
        %754 = vmatprep.mubr.bf16.mxu0 0
        %755 = vmatmul.mubr.bf16.gmra.mrb[0].mxu0 %v656
        %v756 = vpop.f32.mrb[0].mxu0
        %v757 = vadd.f32 %v708, %v756
        %v758 = vpop.f32.mrb[0].mxu0
        %v759 = vpop.f32.mrb[0].mxu0
        %v760 = vpop.f32.mrb[0].mxu0
        %761 = vdwg.mxu0
        %v762 = vpack.c.bf16 %v757, %v757
        %v763 = vld [vmem:[%s9] sm:$0xf]
        %v764 = vld [vmem:[%s9 + $0x4] sm:$0xf]
        %v765 = vld [vmem:[%s9 + $0x8] sm:$0xf]
        %v766 = vld [vmem:[%s9 + $0xc] sm:$0xf]
        %v767 = vld [vmem:[%s10] sm:$0x1]
        %v769 = vlaneseq
        %v770 = vshrl.u32 %v769, 7
        %v771 = vsub.s32 0, %v770
        %v772 = vrot.slane %v767, %v771
        %v778 = vunpack.c.l.b16 %v763
        %v779 = vunpack.c.l.b16 %v764
        %v780 = vunpack.c.l.b16 %v765
        %v781 = vunpack.c.l.b16 %v766
        %v782 = vpack.c.b16 %v779, %v778
        %v783 = vpack.c.b16 %v781, %v780
        %786 = vmatprep.subr.bf16.mxu0 0
        %787 = vmatpush1.bf16.msra.mxu0 %v782
        %788 = vmatprep.subr.bf16.mxu0 0
        %789 = vmatpush1.bf16.msra.mxu0 %v783
        %790 = vmatprep.subr.bf16.mxu0 0
        %791 = vmatpush1.bf16.msra.mxu0 0
        %792 = vmatprep.subr.bf16.mxu0 0
        %793 = vmatpush1.bf16.msra.mxu0 0
        %794 = vmatprep.subr.bf16.mxu0 0
        %795 = vmatpush1.bf16.msra.mxu0 0
        %796 = vmatprep.subr.bf16.mxu0 0
        %797 = vmatpush1.bf16.msra.mxu0 0
        %798 = vmatprep.subr.bf16.mxu0 0
        %799 = vmatpush1.bf16.msra.mxu0 0
        %800 = vmatprep.subr.bf16.mxu0 0
        %801 = vmatpush1.bf16.msra.mxu0 0
        %802 = vmatprep.subr.bf16.mxu0 0
        %803 = vmatpush1.bf16.msra.mxu0 0
        %804 = vmatprep.subr.bf16.mxu0 0
        %805 = vmatpush1.bf16.msra.mxu0 0
        %806 = vmatprep.subr.bf16.mxu0 0
        %807 = vmatpush1.bf16.msra.mxu0 0
        %808 = vmatprep.subr.bf16.mxu0 0
        %809 = vmatpush1.bf16.msra.mxu0 0
        %810 = vmatprep.subr.bf16.mxu0 0
        %811 = vmatpush1.bf16.msra.mxu0 0
        %812 = vmatprep.subr.bf16.mxu0 0
        %813 = vmatpush1.bf16.msra.mxu0 0
        %814 = vmatprep.subr.bf16.mxu0 0
        %815 = vmatpush1.bf16.msra.mxu0 0
        %816 = vmatprep.subr.bf16.mxu0 0
        %817 = vmatpush1.bf16.msra.mxu0 0
        %818 = vmatprep.mubr.bf16.mxu0 0
        %819 = vmatmul.mubr.bf16.gmra.mrb[0].mxu0 %v656
        %v820 = vpop.f32.mrb[0].mxu0
        %v821 = vadd.f32 %v772, %v820
        %v822 = vpop.f32.mrb[0].mxu0
        %v823 = vpop.f32.mrb[0].mxu0
        %v824 = vpop.f32.mrb[0].mxu0
        %825 = vdwg.mxu0
        %v826 = vpack.c.bf16 %v821, %v821
        %v827 = vld [vmem:[%s2] sm:$0x3]
        %v830 = vunpack.c.l.s4 1966171168
        %v831 = vunpack.c.0.s8 %v830
        %v832 = vlaneseq
        %v833 = vshrl.u32 %v832, 7
        %v834 = vsub.s32 %v831, %v833
        %v835 = vrot.slane %v827, %v834
        %v836 = vcombine.high %v835, %v835
        %v837 = vunpack.i.l.s16 %v835
        %v838 = vunpack.i.h.s16 %v835
        %v839 = vunpack.i.l.s16 %v836
        %v840 = vunpack.i.h.s16 %v836
        %v841 = vpack.i.b16 %v837, %v837
        %v842 = vpack.i.b16 %v838, %v838
        %v843 = vpack.i.b16 %v839, %v839
        %v844 = vpack.i.b16 %v840, %v840
        %v845 = vlaneseq
        %v846 = vshrl.u32 %v845, 7
        %v847 = vsub.s32 0, %v846
        %v848 = vrot.slane %v841, %v847
        %v849 = vlaneseq
        %v850 = vshrl.u32 %v849, 7
        %v851 = vsub.s32 0, %v850
        %v852 = vrot.slane %v842, %v851
        %v853 = vlaneseq
        %v854 = vshrl.u32 %v853, 7
        %v855 = vsub.s32 0, %v854
        %v856 = vrot.slane %v843, %v855
        %v857 = vlaneseq
        %v858 = vshrl.u32 %v857, 7
        %v859 = vsub.s32 0, %v858
        %v860 = vrot.slane %v844, %v859
        %v862 = vpack.i.b16 %v848, %v848
        %v864 = vlaneseq
        %v865 = vshrl.u32 %v864, 7
        %v866 = vsub.s32 0, %v865
        %v867 = vrot.slane %v862, %v866
        %v869 = vpack.i.b16 %v852, %v852
        %v871 = vlaneseq
        %v872 = vshrl.u32 %v871, 7
        %v873 = vsub.s32 0, %v872
        %v874 = vrot.slane %v869, %v873
        %v876 = vpack.i.b16 %v856, %v856
        %v878 = vlaneseq
        %v879 = vshrl.u32 %v878, 7
        %v880 = vsub.s32 0, %v879
        %v881 = vrot.slane %v876, %v880
        %v883 = vpack.i.b16 %v860, %v860
        %v885 = vlaneseq
        %v886 = vshrl.u32 %v885, 7
        %v887 = vsub.s32 0, %v886
        %v888 = vrot.slane %v883, %v887
        %v889 = vmul.bf16 %v762, %v867
        %v890 = vmul.bf16 %v762, %v874
        %v891 = vmul.bf16 %v762, %v881
        %v892 = vmul.bf16 %v762, %v888
        %v893 = vmul.bf16 %v826, %v867
        %v894 = vmul.bf16 %v826, %v874
        %v895 = vmul.bf16 %v826, %v881
        %v896 = vmul.bf16 %v826, %v888
        %v897 = vld [vmem:[%s1] sm:$0xff]
        %v899 = vsel %vm602, %v698, 0
        %v902 = vsel %vm602, %v889, 0
        %904 = vmatprep.subr.bf16.mxu0 0
        %905 = vmatpush1.bf16.xpose.msra.mxu0 %v902
        %906 = vmatprep.subr.bf16.mxu0 0
        %907 = vmatpush1.bf16.xpose.msra.mxu0 0
        %908 = vmatprep.subr.bf16.mxu0 0
        %909 = vmatpush1.bf16.xpose.msra.mxu0 0
        %910 = vmatprep.subr.bf16.mxu0 0
        %911 = vmatpush1.bf16.xpose.msra.mxu0 0
        %912 = vmatprep.subr.bf16.mxu0 0
        %913 = vmatpush1.bf16.xpose.msra.mxu0 0
        %914 = vmatprep.subr.bf16.mxu0 0
        %915 = vmatpush1.bf16.xpose.msra.mxu0 0
        %916 = vmatprep.subr.bf16.mxu0 0
        %917 = vmatpush1.bf16.xpose.msra.mxu0 0
        %918 = vmatprep.subr.bf16.mxu0 0
        %919 = vmatpush1.bf16.xpose.msra.mxu0 0
        %920 = vmatprep.subr.bf16.mxu0 0
        %921 = vmatpush1.bf16.xpose.msra.mxu0 0
        %922 = vmatprep.subr.bf16.mxu0 0
        %923 = vmatpush1.bf16.xpose.msra.mxu0 0
        %924 = vmatprep.subr.bf16.mxu0 0
        %925 = vmatpush1.bf16.xpose.msra.mxu0 0
        %926 = vmatprep.subr.bf16.mxu0 0
        %927 = vmatpush1.bf16.xpose.msra.mxu0 0
        %928 = vmatprep.subr.bf16.mxu0 0
        %929 = vmatpush1.bf16.xpose.msra.mxu0 0
        %930 = vmatprep.subr.bf16.mxu0 0
        %931 = vmatpush1.bf16.xpose.msra.mxu0 0
        %932 = vmatprep.subr.bf16.mxu0 0
        %933 = vmatpush1.bf16.xpose.msra.mxu0 0
        %934 = vmatprep.subr.bf16.mxu0 0
        %935 = vmatpush1.bf16.xpose.msra.mxu0 0
        %936 = vmatprep.mubr.bf16.mxu0 0
        %937 = vmatmul.mubr.bf16.gmra.mrb[0].mxu0 %v899
        %v938 = vpop.f32.mrb[0].mxu0
        %v939 = vadd.f32 %v897, %v938
        %v940 = vpop.f32.mrb[0].mxu0
        %v941 = vpop.f32.mrb[0].mxu0
        %v942 = vpop.f32.mrb[0].mxu0
        %943 = vdwg.mxu0
        %v945 = vsel %vm602, %v890, 0
        %947 = vmatprep.subr.bf16.mxu0 0
        %948 = vmatpush1.bf16.xpose.msra.mxu0 %v945
        %949 = vmatprep.subr.bf16.mxu0 0
        %950 = vmatpush1.bf16.xpose.msra.mxu0 0
        %951 = vmatprep.subr.bf16.mxu0 0
        %952 = vmatpush1.bf16.xpose.msra.mxu0 0
        %953 = vmatprep.subr.bf16.mxu0 0
        %954 = vmatpush1.bf16.xpose.msra.mxu0 0
        %955 = vmatprep.subr.bf16.mxu0 0
        %956 = vmatpush1.bf16.xpose.msra.mxu0 0
        %957 = vmatprep.subr.bf16.mxu0 0
        %958 = vmatpush1.bf16.xpose.msra.mxu0 0
        %959 = vmatprep.subr.bf16.mxu0 0
        %960 = vmatpush1.bf16.xpose.msra.mxu0 0
        %961 = vmatprep.subr.bf16.mxu0 0
        %962 = vmatpush1.bf16.xpose.msra.mxu0 0
        %963 = vmatprep.subr.bf16.mxu0 0
        %964 = vmatpush1.bf16.xpose.msra.mxu0 0
        %965 = vmatprep.subr.bf16.mxu0 0
        %966 = vmatpush1.bf16.xpose.msra.mxu0 0
        %967 = vmatprep.subr.bf16.mxu0 0
        %968 = vmatpush1.bf16.xpose.msra.mxu0 0
        %969 = vmatprep.subr.bf16.mxu0 0
        %970 = vmatpush1.bf16.xpose.msra.mxu0 0
        %971 = vmatprep.subr.bf16.mxu0 0
        %972 = vmatpush1.bf16.xpose.msra.mxu0 0
        %973 = vmatprep.subr.bf16.mxu0 0
        %974 = vmatpush1.bf16.xpose.msra.mxu0 0
        %975 = vmatprep.subr.bf16.mxu0 0
        %976 = vmatpush1.bf16.xpose.msra.mxu0 0
        %977 = vmatprep.subr.bf16.mxu0 0
        %978 = vmatpush1.bf16.xpose.msra.mxu0 0
        %979 = vmatprep.mubr.bf16.mxu0 0
        %980 = vmatmul.mubr.bf16.gmra.mrb[0].mxu0 %v899
        %v981 = vpop.f32.mrb[0].mxu0
        %v982 = vadd.f32 %v897, %v981
        %v983 = vpop.f32.mrb[0].mxu0
        %v984 = vpop.f32.mrb[0].mxu0
        %v985 = vpop.f32.mrb[0].mxu0
        %986 = vdwg.mxu0
        %v988 = vsel %vm602, %v891, 0
        %990 = vmatprep.subr.bf16.mxu0 0
        %991 = vmatpush1.bf16.xpose.msra.mxu0 %v988
        %992 = vmatprep.subr.bf16.mxu0 0
        %993 = vmatpush1.bf16.xpose.msra.mxu0 0
        %994 = vmatprep.subr.bf16.mxu0 0
        %995 = vmatpush1.bf16.xpose.msra.mxu0 0
        %996 = vmatprep.subr.bf16.mxu0 0
        %997 = vmatpush1.bf16.xpose.msra.mxu0 0
        %998 = vmatprep.subr.bf16.mxu0 0
        %999 = vmatpush1.bf16.xpose.msra.mxu0 0
        %1000 = vmatprep.subr.bf16.mxu0 0
        %1001 = vmatpush1.bf16.xpose.msra.mxu0 0
        %1002 = vmatprep.subr.bf16.mxu0 0
        %1003 = vmatpush1.bf16.xpose.msra.mxu0 0
        %1004 = vmatprep.subr.bf16.mxu0 0
        %1005 = vmatpush1.bf16.xpose.msra.mxu0 0
        %1006 = vmatprep.subr.bf16.mxu0 0
        %1007 = vmatpush1.bf16.xpose.msra.mxu0 0
        %1008 = vmatprep.subr.bf16.mxu0 0
        %1009 = vmatpush1.bf16.xpose.msra.mxu0 0
        %1010 = vmatprep.subr.bf16.mxu0 0
        %1011 = vmatpush1.bf16.xpose.msra.mxu0 0
        %1012 = vmatprep.subr.bf16.mxu0 0
        %1013 = vmatpush1.bf16.xpose.msra.mxu0 0
        %1014 = vmatprep.subr.bf16.mxu0 0
        %1015 = vmatpush1.bf16.xpose.msra.mxu0 0
        %1016 = vmatprep.subr.bf16.mxu0 0
        %1017 = vmatpush1.bf16.xpose.msra.mxu0 0
        %1018 = vmatprep.subr.bf16.mxu0 0
        %1019 = vmatpush1.bf16.xpose.msra.mxu0 0
        %1020 = vmatprep.subr.bf16.mxu0 0
        %1021 = vmatpush1.bf16.xpose.msra.mxu0 0
        %1022 = vmatprep.mubr.bf16.mxu0 0
        %1023 = vmatmul.mubr.bf16.gmra.mrb[0].mxu0 %v899
        %v1024 = vpop.f32.mrb[0].mxu0
        %v1025 = vadd.f32 %v897, %v1024
        %v1026 = vpop.f32.mrb[0].mxu0
        %v1027 = vpop.f32.mrb[0].mxu0
        %v1028 = vpop.f32.mrb[0].mxu0
        %1029 = vdwg.mxu0
        %v1031 = vsel %vm602, %v892, 0
        %1033 = vmatprep.subr.bf16.mxu0 0
        %1034 = vmatpush1.bf16.xpose.msra.mxu0 %v1031
        %1035 = vmatprep.subr.bf16.mxu0 0
        %1036 = vmatpush1.bf16.xpose.msra.mxu0 0
        %1037 = vmatprep.subr.bf16.mxu0 0
        %1038 = vmatpush1.bf16.xpose.msra.mxu0 0
        %1039 = vmatprep.subr.bf16.mxu0 0
        %1040 = vmatpush1.bf16.xpose.msra.mxu0 0
        %1041 = vmatprep.subr.bf16.mxu0 0
        %1042 = vmatpush1.bf16.xpose.msra.mxu0 0
        %1043 = vmatprep.subr.bf16.mxu0 0
        %1044 = vmatpush1.bf16.xpose.msra.mxu0 0
        %1045 = vmatprep.subr.bf16.mxu0 0
        %1046 = vmatpush1.bf16.xpose.msra.mxu0 0
        %1047 = vmatprep.subr.bf16.mxu0 0
        %1048 = vmatpush1.bf16.xpose.msra.mxu0 0
        %1049 = vmatprep.subr.bf16.mxu0 0
        %1050 = vmatpush1.bf16.xpose.msra.mxu0 0
        %1051 = vmatprep.subr.bf16.mxu0 0
        %1052 = vmatpush1.bf16.xpose.msra.mxu0 0
        %1053 = vmatprep.subr.bf16.mxu0 0
        %1054 = vmatpush1.bf16.xpose.msra.mxu0 0
        %1055 = vmatprep.subr.bf16.mxu0 0
        %1056 = vmatpush1.bf16.xpose.msra.mxu0 0
        %1057 = vmatprep.subr.bf16.mxu0 0
        %1058 = vmatpush1.bf16.xpose.msra.mxu0 0
        %1059 = vmatprep.subr.bf16.mxu0 0
        %1060 = vmatpush1.bf16.xpose.msra.mxu0 0
        %1061 = vmatprep.subr.bf16.mxu0 0
        %1062 = vmatpush1.bf16.xpose.msra.mxu0 0
        %1063 = vmatprep.subr.bf16.mxu0 0
        %1064 = vmatpush1.bf16.xpose.msra.mxu0 0
        %1065 = vmatprep.mubr.bf16.mxu0 0
        %1066 = vmatmul.mubr.bf16.gmra.mrb[0].mxu0 %v899
        %v1067 = vpop.f32.mrb[0].mxu0
        %v1068 = vadd.f32 %v897, %v1067
        %v1069 = vpop.f32.mrb[0].mxu0
        %v1070 = vpop.f32.mrb[0].mxu0
        %v1071 = vpop.f32.mrb[0].mxu0
        %1072 = vdwg.mxu0
        %vm1073 = vcmask 64512
        %v1074 = vsel %vm1073, %v939, -inf
        %1075 = vmax.xlane.f32.xlu0 %v1074
        %v1076 = vpop.xlane.xlu0 %1075
        %v1077 = vsel %vm1073, %v982, -inf
        %1078 = vmax.xlane.f32.xlu0 %v1077
        %v1079 = vpop.xlane.xlu0 %1078
        %v1080 = vsel %vm1073, %v1025, -inf
        %1081 = vmax.xlane.f32.xlu0 %v1080
        %v1082 = vpop.xlane.xlu0 %1081
        %v1083 = vsel %vm1073, %v1068, -inf
        %1084 = vmax.xlane.f32.xlu0 %v1083
        %v1085 = vpop.xlane.xlu0 %1084
        %v1086 = vsub.f32 %v939, %v1076
        %v1087 = vsub.f32 %v982, %v1079
        %v1088 = vsub.f32 %v1025, %v1082
        %v1089 = vsub.f32 %v1068, %v1085
        %v1090 = vmul.f32 %v1086, 1.442695
        %v1091 = vpow.pop %v1090
        %v1092 = vmul.f32 %v1087, 1.442695
        %v1093 = vpow.pop %v1092
        %v1094 = vmul.f32 %v1088, 1.442695
        %v1095 = vpow.pop %v1094
        %v1096 = vmul.f32 %v1089, 1.442695
        %v1097 = vpow.pop %v1096
        %v1098 = vsel %vm1073, %v1091, 0.0
        %1099 = vadd.xlane.f32.xlu0 %v1098
        %v1100 = vpop.xlane.xlu0 %1099
        %v1101 = vsel %vm1073, %v1093, 0.0
        %1102 = vadd.xlane.f32.xlu0 %v1101
        %v1103 = vpop.xlane.xlu0 %1102
        %v1104 = vsel %vm1073, %v1095, 0.0
        %1105 = vadd.xlane.f32.xlu0 %v1104
        %v1106 = vpop.xlane.xlu0 %1105
        %v1107 = vsel %vm1073, %v1097, 0.0
        %1108 = vadd.xlane.f32.xlu0 %v1107
        %v1109 = vpop.xlane.xlu0 %1108
        %v1110 = vrcp.pop %v1100
        %v1111 = vmul.f32 %v1091, %v1110
        %v1112 = vrcp.pop %v1103
        %v1113 = vmul.f32 %v1093, %v1112
        %v1114 = vrcp.pop %v1106
        %v1115 = vmul.f32 %v1095, %v1114
        %v1116 = vrcp.pop %v1109
        %v1117 = vmul.f32 %v1097, %v1116
        %v1118 = vpack.c.bf16 %v1111, %v1111
        %v1119 = vpack.c.bf16 %v1113, %v1113
        %v1120 = vpack.c.bf16 %v1115, %v1115
        %v1121 = vpack.c.bf16 %v1117, %v1117
        %v1123 = vsel %vm1073, %v1118, 0
        %vm1125 = vcmask 1043456
        %v1127 = vsel %vm1125, %v893, 0
        %1129 = vmatprep.subr.bf16.mxu0 0
        %1130 = vmatpush1.bf16.msra.mxu0 %v1127
        %1131 = vmatprep.subr.bf16.mxu0 0
        %1132 = vmatpush1.bf16.msra.mxu0 0
        %1133 = vmatprep.subr.bf16.mxu0 0
        %1134 = vmatpush1.bf16.msra.mxu0 0
        %1135 = vmatprep.subr.bf16.mxu0 0
        %1136 = vmatpush1.bf16.msra.mxu0 0
        %1137 = vmatprep.subr.bf16.mxu0 0
        %1138 = vmatpush1.bf16.msra.mxu0 0
        %1139 = vmatprep.subr.bf16.mxu0 0
        %1140 = vmatpush1.bf16.msra.mxu0 0
        %1141 = vmatprep.subr.bf16.mxu0 0
        %1142 = vmatpush1.bf16.msra.mxu0 0
        %1143 = vmatprep.subr.bf16.mxu0 0
        %1144 = vmatpush1.bf16.msra.mxu0 0
        %1145 = vmatprep.subr.bf16.mxu0 0
        %1146 = vmatpush1.bf16.msra.mxu0 0
        %1147 = vmatprep.subr.bf16.mxu0 0
        %1148 = vmatpush1.bf16.msra.mxu0 0
        %1149 = vmatprep.subr.bf16.mxu0 0
        %1150 = vmatpush1.bf16.msra.mxu0 0
        %1151 = vmatprep.subr.bf16.mxu0 0
        %1152 = vmatpush1.bf16.msra.mxu0 0
        %1153 = vmatprep.subr.bf16.mxu0 0
        %1154 = vmatpush1.bf16.msra.mxu0 0
        %1155 = vmatprep.subr.bf16.mxu0 0
        %1156 = vmatpush1.bf16.msra.mxu0 0
        %1157 = vmatprep.subr.bf16.mxu0 0
        %1158 = vmatpush1.bf16.msra.mxu0 0
        %1159 = vmatprep.subr.bf16.mxu0 0
        %1160 = vmatpush1.bf16.msra.mxu0 0
        %1161 = vmatprep.mubr.bf16.mxu0 0
        %1162 = vmatmul.mubr.bf16.gmra.mrb[0].mxu0 %v1123
        %v1163 = vpop.f32.mrb[0].mxu0
        %v1164 = vadd.f32 0.0, %v1163
        %v1165 = vpop.f32.mrb[0].mxu0
        %v1166 = vpop.f32.mrb[0].mxu0
        %v1167 = vpop.f32.mrb[0].mxu0
        %1168 = vdwg.mxu0
        %v1170 = vsel %vm1073, %v1119, 0
        %v1173 = vsel %vm1125, %v894, 0
        %1175 = vmatprep.subr.bf16.mxu0 0
        %1176 = vmatpush1.bf16.msra.mxu0 %v1173
        %1177 = vmatprep.subr.bf16.mxu0 0
        %1178 = vmatpush1.bf16.msra.mxu0 0
        %1179 = vmatprep.subr.bf16.mxu0 0
        %1180 = vmatpush1.bf16.msra.mxu0 0
        %1181 = vmatprep.subr.bf16.mxu0 0
        %1182 = vmatpush1.bf16.msra.mxu0 0
        %1183 = vmatprep.subr.bf16.mxu0 0
        %1184 = vmatpush1.bf16.msra.mxu0 0
        %1185 = vmatprep.subr.bf16.mxu0 0
        %1186 = vmatpush1.bf16.msra.mxu0 0
        %1187 = vmatprep.subr.bf16.mxu0 0
        %1188 = vmatpush1.bf16.msra.mxu0 0
        %1189 = vmatprep.subr.bf16.mxu0 0
        %1190 = vmatpush1.bf16.msra.mxu0 0
        %1191 = vmatprep.subr.bf16.mxu0 0
        %1192 = vmatpush1.bf16.msra.mxu0 0
        %1193 = vmatprep.subr.bf16.mxu0 0
        %1194 = vmatpush1.bf16.msra.mxu0 0
        %1195 = vmatprep.subr.bf16.mxu0 0
        %1196 = vmatpush1.bf16.msra.mxu0 0
        %1197 = vmatprep.subr.bf16.mxu0 0
        %1198 = vmatpush1.bf16.msra.mxu0 0
        %1199 = vmatprep.subr.bf16.mxu0 0
        %1200 = vmatpush1.bf16.msra.mxu0 0
        %1201 = vmatprep.subr.bf16.mxu0 0
        %1202 = vmatpush1.bf16.msra.mxu0 0
        %1203 = vmatprep.subr.bf16.mxu0 0
        %1204 = vmatpush1.bf16.msra.mxu0 0
        %1205 = vmatprep.subr.bf16.mxu0 0
        %1206 = vmatpush1.bf16.msra.mxu0 0
        %1207 = vmatprep.mubr.bf16.mxu0 0
        %1208 = vmatmul.mubr.bf16.gmra.mrb[0].mxu0 %v1170
        %v1209 = vpop.f32.mrb[0].mxu0
        %v1210 = vadd.f32 0.0, %v1209
        %v1211 = vpop.f32.mrb[0].mxu0
        %v1212 = vpop.f32.mrb[0].mxu0
        %v1213 = vpop.f32.mrb[0].mxu0
        %1214 = vdwg.mxu0
        %v1216 = vsel %vm1073, %v1120, 0
        %v1219 = vsel %vm1125, %v895, 0
        %1221 = vmatprep.subr.bf16.mxu0 0
        %1222 = vmatpush1.bf16.msra.mxu0 %v1219
        %1223 = vmatprep.subr.bf16.mxu0 0
        %1224 = vmatpush1.bf16.msra.mxu0 0
        %1225 = vmatprep.subr.bf16.mxu0 0
        %1226 = vmatpush1.bf16.msra.mxu0 0
        %1227 = vmatprep.subr.bf16.mxu0 0
        %1228 = vmatpush1.bf16.msra.mxu0 0
        %1229 = vmatprep.subr.bf16.mxu0 0
        %1230 = vmatpush1.bf16.msra.mxu0 0
        %1231 = vmatprep.subr.bf16.mxu0 0
        %1232 = vmatpush1.bf16.msra.mxu0 0
        %1233 = vmatprep.subr.bf16.mxu0 0
        %1234 = vmatpush1.bf16.msra.mxu0 0
        %1235 = vmatprep.subr.bf16.mxu0 0
        %1236 = vmatpush1.bf16.msra.mxu0 0
        %1237 = vmatprep.subr.bf16.mxu0 0
        %1238 = vmatpush1.bf16.msra.mxu0 0
        %1239 = vmatprep.subr.bf16.mxu0 0
        %1240 = vmatpush1.bf16.msra.mxu0 0
        %1241 = vmatprep.subr.bf16.mxu0 0
        %1242 = vmatpush1.bf16.msra.mxu0 0
        %1243 = vmatprep.subr.bf16.mxu0 0
        %1244 = vmatpush1.bf16.msra.mxu0 0
        %1245 = vmatprep.subr.bf16.mxu0 0
        %1246 = vmatpush1.bf16.msra.mxu0 0
        %1247 = vmatprep.subr.bf16.mxu0 0
        %1248 = vmatpush1.bf16.msra.mxu0 0
        %1249 = vmatprep.subr.bf16.mxu0 0
        %1250 = vmatpush1.bf16.msra.mxu0 0
        %1251 = vmatprep.subr.bf16.mxu0 0
        %1252 = vmatpush1.bf16.msra.mxu0 0
        %1253 = vmatprep.mubr.bf16.mxu0 0
        %1254 = vmatmul.mubr.bf16.gmra.mrb[0].mxu0 %v1216
        %v1255 = vpop.f32.mrb[0].mxu0
        %v1256 = vadd.f32 0.0, %v1255
        %v1257 = vpop.f32.mrb[0].mxu0
        %v1258 = vpop.f32.mrb[0].mxu0
        %v1259 = vpop.f32.mrb[0].mxu0
        %1260 = vdwg.mxu0
        %v1262 = vsel %vm1073, %v1121, 0
        %v1265 = vsel %vm1125, %v896, 0
        %1267 = vmatprep.subr.bf16.mxu0 0
        %1268 = vmatpush1.bf16.msra.mxu0 %v1265
        %1269 = vmatprep.subr.bf16.mxu0 0
        %1270 = vmatpush1.bf16.msra.mxu0 0
        %1271 = vmatprep.subr.bf16.mxu0 0
        %1272 = vmatpush1.bf16.msra.mxu0 0
        %1273 = vmatprep.subr.bf16.mxu0 0
        %1274 = vmatpush1.bf16.msra.mxu0 0
        %1275 = vmatprep.subr.bf16.mxu0 0
        %1276 = vmatpush1.bf16.msra.mxu0 0
        %1277 = vmatprep.subr.bf16.mxu0 0
        %1278 = vmatpush1.bf16.msra.mxu0 0
        %1279 = vmatprep.subr.bf16.mxu0 0
        %1280 = vmatpush1.bf16.msra.mxu0 0
        %1281 = vmatprep.subr.bf16.mxu0 0
        %1282 = vmatpush1.bf16.msra.mxu0 0
        %1283 = vmatprep.subr.bf16.mxu0 0
        %1284 = vmatpush1.bf16.msra.mxu0 0
        %1285 = vmatprep.subr.bf16.mxu0 0
        %1286 = vmatpush1.bf16.msra.mxu0 0
        %1287 = vmatprep.subr.bf16.mxu0 0
        %1288 = vmatpush1.bf16.msra.mxu0 0
        %1289 = vmatprep.subr.bf16.mxu0 0
        %1290 = vmatpush1.bf16.msra.mxu0 0
        %1291 = vmatprep.subr.bf16.mxu0 0
        %1292 = vmatpush1.bf16.msra.mxu0 0
        %1293 = vmatprep.subr.bf16.mxu0 0
        %1294 = vmatpush1.bf16.msra.mxu0 0
        %1295 = vmatprep.subr.bf16.mxu0 0
        %1296 = vmatpush1.bf16.msra.mxu0 0
        %1297 = vmatprep.subr.bf16.mxu0 0
        %1298 = vmatpush1.bf16.msra.mxu0 0
        %1299 = vmatprep.mubr.bf16.mxu0 0
        %1300 = vmatmul.mubr.bf16.gmra.mrb[0].mxu0 %v1262
        %v1301 = vpop.f32.mrb[0].mxu0
        %v1302 = vadd.f32 0.0, %v1301
        %v1303 = vpop.f32.mrb[0].mxu0
        %v1304 = vpop.f32.mrb[0].mxu0
        %v1305 = vpop.f32.mrb[0].mxu0
        %1306 = vdwg.mxu0
        %v1307 = vsel %vm602, %v1164, 0.0
        %v1308 = vsel %vm602, %v1210, 0.0
        %v1309 = vadd.f32 %v1307, %v1308
        %v1310 = vsel %vm602, %v1256, 0.0
        %v1311 = vadd.f32 %v1309, %v1310
        %v1312 = vsel %vm602, %v1302, 0.0
        %v1313 = vadd.f32 %v1311, %v1312
        %v1314 = vpack.c.bf16 %v1313, %v1313
        %v1315 = vld [vmem:[%s11] sm:$0xf]
        %v1316 = vld [vmem:[%s11 + $0x4] sm:$0xf]
        %v1317 = vld [vmem:[%s11 + $0x8] sm:$0xf]
        %v1318 = vld [vmem:[%s11 + $0xc] sm:$0xf]
        %v1319 = vld [vmem:[%s12] sm:$0x1]
        %v1321 = vlaneseq
        %v1322 = vshrl.u32 %v1321, 7
        %v1323 = vsub.s32 0, %v1322
        %v1324 = vrot.slane %v1319, %v1323
        %v1330 = vunpack.c.l.b16 %v1315
        %v1331 = vunpack.c.l.b16 %v1316
        %v1332 = vunpack.c.l.b16 %v1317
        %v1333 = vunpack.c.l.b16 %v1318
        %v1334 = vpack.c.b16 %v1331, %v1330
        %v1335 = vpack.c.b16 %v1333, %v1332
        %v1339 = vsel %vm602, %v1314, 0
        %1341 = vmatprep.subr.bf16.mxu0 0
        %1342 = vmatpush1.bf16.msra.mxu0 %v1334
        %1343 = vmatprep.subr.bf16.mxu0 0
        %1344 = vmatpush1.bf16.msra.mxu0 %v1335
        %1345 = vmatprep.subr.bf16.mxu0 0
        %1346 = vmatpush1.bf16.msra.mxu0 0
        %1347 = vmatprep.subr.bf16.mxu0 0
        %1348 = vmatpush1.bf16.msra.mxu0 0
        %1349 = vmatprep.subr.bf16.mxu0 0
        %1350 = vmatpush1.bf16.msra.mxu0 0
        %1351 = vmatprep.subr.bf16.mxu0 0
        %1352 = vmatpush1.bf16.msra.mxu0 0
        %1353 = vmatprep.subr.bf16.mxu0 0
        %1354 = vmatpush1.bf16.msra.mxu0 0
        %1355 = vmatprep.subr.bf16.mxu0 0
        %1356 = vmatpush1.bf16.msra.mxu0 0
        %1357 = vmatprep.subr.bf16.mxu0 0
        %1358 = vmatpush1.bf16.msra.mxu0 0
        %1359 = vmatprep.subr.bf16.mxu0 0
        %1360 = vmatpush1.bf16.msra.mxu0 0
        %1361 = vmatprep.subr.bf16.mxu0 0
        %1362 = vmatpush1.bf16.msra.mxu0 0
        %1363 = vmatprep.subr.bf16.mxu0 0
        %1364 = vmatpush1.bf16.msra.mxu0 0
        %1365 = vmatprep.subr.bf16.mxu0 0
        %1366 = vmatpush1.bf16.msra.mxu0 0
        %1367 = vmatprep.subr.bf16.mxu0 0
        %1368 = vmatpush1.bf16.msra.mxu0 0
        %1369 = vmatprep.subr.bf16.mxu0 0
        %1370 = vmatpush1.bf16.msra.mxu0 0
        %1371 = vmatprep.subr.bf16.mxu0 0
        %1372 = vmatpush1.bf16.msra.mxu0 0
        %1373 = vmatprep.mubr.bf16.mxu0 0
        %1374 = vmatmul.mubr.bf16.gmra.mrb[0].mxu0 %v1339
        %v1375 = vpop.f32.mrb[0].mxu0
        %v1376 = vadd.f32 %v1324, %v1375
        %v1377 = vpop.f32.mrb[0].mxu0
        %v1378 = vpop.f32.mrb[0].mxu0
        %v1379 = vpop.f32.mrb[0].mxu0
        %1380 = vdwg.mxu0
        %v1381 = vadd.f32 %v599, %v1376
        %v1382 = vld [vmem:[%s13] sm:$0x1]
        %v1383 = vld [vmem:[%s14] sm:$0x1]
        %v1384 = vsel %vm602, %v1381, 0.0
        %1385 = vadd.xlane.f32.xlu0 %v1384
        %v1386 = vpop.xlane.xlu0 %1385
        %v1387 = vmul.f32 %v1386, %v606
        %v1388 = vsub.f32 %v1381, %v1387
        %v1389 = vmul.f32 %v1388, %v1388
        %v1390 = vsel %vm602, %v1389, 0.0
        %1391 = vadd.xlane.f32.xlu0 %v1390
        %v1392 = vpop.xlane.xlu0 %1391
        %v1393 = vmul.f32 %v1392, %v606
        %v1394 = vadd.f32 %v1393, 1e-05
        %v1395 = vrsqrt.pop %v1394
        %v1396 = vmul.f32 %v1388, %v1395
        %v1398 = vlaneseq
        %v1399 = vshrl.u32 %v1398, 7
        %v1400 = vsub.s32 0, %v1399
        %v1401 = vrot.slane %v1382, %v1400
        %v1403 = vmul.f32 %v1396, %v1401
        %v1405 = vlaneseq
        %v1406 = vshrl.u32 %v1405, 7
        %v1407 = vsub.s32 0, %v1406
        %v1408 = vrot.slane %v1383, %v1407
        %v1410 = vadd.f32 %v1403, %v1408
        %v1411 = vpack.c.bf16 %v1410, %v1410
        %v1412 = vld [vmem:[%s15] sm:$0xf]
        %v1413 = vld [vmem:[%s15 + $0x4] sm:$0xf]
        %v1414 = vld [vmem:[%s15 + $0x8] sm:$0xf]
        %v1415 = vld [vmem:[%s15 + $0xc] sm:$0xf]
        %v1416 = vld [vmem:[%s16] sm:$0x1]
        %v1418 = vlaneseq
        %v1419 = vshrl.u32 %v1418, 7
        %v1420 = vsub.s32 0, %v1419
        %v1421 = vrot.slane %v1416, %v1420
        %v1427 = vunpack.c.l.b16 %v1412
        %v1428 = vunpack.c.l.b16 %v1413
        %v1429 = vunpack.c.l.b16 %v1414
        %v1430 = vunpack.c.l.b16 %v1415
        %v1431 = vpack.c.b16 %v1428, %v1427
        %v1432 = vpack.c.b16 %v1430, %v1429
        %v1436 = vsel %vm602, %v1411, 0
        %1438 = vmatprep.subr.bf16.mxu0 0
        %1439 = vmatpush1.bf16.msra.mxu0 %v1431
        %1440 = vmatprep.subr.bf16.mxu0 0
        %1441 = vmatpush1.bf16.msra.mxu0 %v1432
        %1442 = vmatprep.subr.bf16.mxu0 0
        %1443 = vmatpush1.bf16.msra.mxu0 0
        %1444 = vmatprep.subr.bf16.mxu0 0
        %1445 = vmatpush1.bf16.msra.mxu0 0
        %1446 = vmatprep.subr.bf16.mxu0 0
        %1447 = vmatpush1.bf16.msra.mxu0 0
        %1448 = vmatprep.subr.bf16.mxu0 0
        %1449 = vmatpush1.bf16.msra.mxu0 0
        %1450 = vmatprep.subr.bf16.mxu0 0
        %1451 = vmatpush1.bf16.msra.mxu0 0
        %1452 = vmatprep.subr.bf16.mxu0 0
        %1453 = vmatpush1.bf16.msra.mxu0 0
        %1454 = vmatprep.subr.bf16.mxu0 0
        %1455 = vmatpush1.bf16.msra.mxu0 0
        %1456 = vmatprep.subr.bf16.mxu0 0
        %1457 = vmatpush1.bf16.msra.mxu0 0
        %1458 = vmatprep.subr.bf16.mxu0 0
        %1459 = vmatpush1.bf16.msra.mxu0 0
        %1460 = vmatprep.subr.bf16.mxu0 0
        %1461 = vmatpush1.bf16.msra.mxu0 0
        %1462 = vmatprep.subr.bf16.mxu0 0
        %1463 = vmatpush1.bf16.msra.mxu0 0
        %1464 = vmatprep.subr.bf16.mxu0 0
        %1465 = vmatpush1.bf16.msra.mxu0 0
        %1466 = vmatprep.subr.bf16.mxu0 0
        %1467 = vmatpush1.bf16.msra.mxu0 0
        %1468 = vmatprep.subr.bf16.mxu0 0
        %1469 = vmatpush1.bf16.msra.mxu0 0
        %1470 = vmatprep.mubr.bf16.mxu0 0
        %1471 = vmatmul.mubr.bf16.gmra.mrb[0].mxu0 %v1436
        %v1472 = vpop.f32.mrb[0].mxu0
        %v1473 = vadd.f32 %v1421, %v1472
        %v1474 = vpop.f32.mrb[0].mxu0
        %v1475 = vpop.f32.mrb[0].mxu0
        %v1476 = vpop.f32.mrb[0].mxu0
        %1477 = vdwg.mxu0
        %v1478 = vmul.f32 %v1473, 0.5
        %v1479 = vmul.f32 %v1473, 0.044715
        %v1480 = vmul.f32 %v1479, %v1473
        %v1481 = vmul.f32 %v1480, %v1473
        %v1482 = vadd.f32 %v1473, %v1481
        %v1483 = vmul.f32 %v1482, 0.7978845
        %v1484 = vtanh.pop %v1483
        %v1485 = vadd.f32 %v1484, 1.0
        %v1486 = vmul.f32 %v1478, %v1485
        %v1487 = vpack.c.bf16 %v1486, %v1486
        %v1488 = vld [vmem:[%s17] sm:$0xf]
        %v1489 = vld [vmem:[%s17 + $0x4] sm:$0xf]
        %v1490 = vld [vmem:[%s17 + $0x8] sm:$0xf]
        %v1491 = vld [vmem:[%s17 + $0xc] sm:$0xf]
        %v1492 = vld [vmem:[%s17 + $0x10] sm:$0xf]
        %v1493 = vld [vmem:[%s17 + $0x14] sm:$0xf]
        %v1494 = vld [vmem:[%s17 + $0x18] sm:$0xf]
        %v1495 = vld [vmem:[%s17 + $0x1c] sm:$0xf]
        %v1496 = vld [vmem:[%s17 + $0x20] sm:$0xf]
        %v1497 = vld [vmem:[%s17 + $0x24] sm:$0xf]
        %v1498 = vld [vmem:[%s17 + $0x28] sm:$0xf]
        %v1499 = vld [vmem:[%s17 + $0x2c] sm:$0xf]
        %v1500 = vld [vmem:[%s17 + $0x30] sm:$0xf]
        %v1501 = vld [vmem:[%s17 + $0x34] sm:$0xf]
        %v1502 = vld [vmem:[%s17 + $0x38] sm:$0xf]
        %v1503 = vld [vmem:[%s17 + $0x3c] sm:$0xf]
        %v1504 = vld [vmem:[%s18] sm:$0x1]
        %v1506 = vlaneseq
        %v1507 = vshrl.u32 %v1506, 7
        %v1508 = vsub.s32 0, %v1507
        %v1509 = vrot.slane %v1504, %v1508
        %v1527 = vunpack.c.l.b16 %v1488
        %v1528 = vunpack.c.l.b16 %v1489
        %v1529 = vunpack.c.l.b16 %v1490
        %v1530 = vunpack.c.l.b16 %v1491
        %v1531 = vunpack.c.l.b16 %v1492
        %v1532 = vunpack.c.l.b16 %v1493
        %v1533 = vunpack.c.l.b16 %v1494
        %v1534 = vunpack.c.l.b16 %v1495
        %v1535 = vunpack.c.l.b16 %v1496
        %v1536 = vunpack.c.l.b16 %v1497
        %v1537 = vunpack.c.l.b16 %v1498
        %v1538 = vunpack.c.l.b16 %v1499
        %v1539 = vunpack.c.l.b16 %v1500
        %v1540 = vunpack.c.l.b16 %v1501
        %v1541 = vunpack.c.l.b16 %v1502
        %v1542 = vunpack.c.l.b16 %v1503
        %v1543 = vpack.c.b16 %v1528, %v1527
        %v1544 = vpack.c.b16 %v1530, %v1529
        %v1545 = vpack.c.b16 %v1532, %v1531
        %v1546 = vpack.c.b16 %v1534, %v1533
        %v1547 = vpack.c.b16 %v1536, %v1535
        %v1548 = vpack.c.b16 %v1538, %v1537
        %v1549 = vpack.c.b16 %v1540, %v1539
        %v1550 = vpack.c.b16 %v1542, %v1541
        %1559 = vmatprep.subr.bf16.mxu0 0
        %1560 = vmatpush1.bf16.msra.mxu0 %v1543
        %1561 = vmatprep.subr.bf16.mxu0 0
        %1562 = vmatpush1.bf16.msra.mxu0 %v1544
        %1563 = vmatprep.subr.bf16.mxu0 0
        %1564 = vmatpush1.bf16.msra.mxu0 %v1545
        %1565 = vmatprep.subr.bf16.mxu0 0
        %1566 = vmatpush1.bf16.msra.mxu0 %v1546
        %1567 = vmatprep.subr.bf16.mxu0 0
        %1568 = vmatpush1.bf16.msra.mxu0 %v1547
        %1569 = vmatprep.subr.bf16.mxu0 0
        %1570 = vmatpush1.bf16.msra.mxu0 %v1548
        %1571 = vmatprep.subr.bf16.mxu0 0
        %1572 = vmatpush1.bf16.msra.mxu0 %v1549
        %1573 = vmatprep.subr.bf16.mxu0 0
        %1574 = vmatpush1.bf16.msra.mxu0 %v1550
        %1575 = vmatprep.subr.bf16.mxu0 0
        %1576 = vmatpush1.bf16.msra.mxu0 0
        %1577 = vmatprep.subr.bf16.mxu0 0
        %1578 = vmatpush1.bf16.msra.mxu0 0
        %1579 = vmatprep.subr.bf16.mxu0 0
        %1580 = vmatpush1.bf16.msra.mxu0 0
        %1581 = vmatprep.subr.bf16.mxu0 0
        %1582 = vmatpush1.bf16.msra.mxu0 0
        %1583 = vmatprep.subr.bf16.mxu0 0
        %1584 = vmatpush1.bf16.msra.mxu0 0
        %1585 = vmatprep.subr.bf16.mxu0 0
        %1586 = vmatpush1.bf16.msra.mxu0 0
        %1587 = vmatprep.subr.bf16.mxu0 0
        %1588 = vmatpush1.bf16.msra.mxu0 0
        %1589 = vmatprep.subr.bf16.mxu0 0
        %1590 = vmatpush1.bf16.msra.mxu0 0
        %1591 = vmatprep.mubr.bf16.mxu0 0
        %1592 = vmatmul.mubr.bf16.gmra.mrb[0].mxu0 %v1487
        %v1593 = vpop.f32.mrb[0].mxu0
        %v1594 = vadd.f32 %v1509, %v1593
        %v1595 = vpop.f32.mrb[0].mxu0
        %v1596 = vpop.f32.mrb[0].mxu0
        %v1597 = vpop.f32.mrb[0].mxu0
        %1598 = vdwg.mxu0
        %v1599 = vadd.f32 %v1381, %v1594
        %1600 = vst.msk [vmem:[%s593] sm:$0xff] %vm602, %v1599
        %s1601 = sand.u32 %s445, 1
        %s1602 = scalar_lea.sflag [#allocation3], %s1601
        %s1603 = sand.u32 %s445, 1
        %s1604 = smul.addr %s1603, 8
        %s1605 = scalar_lea.vmem [#allocation2], %s1604
        // Predicated region
        $region97: #{transformer_block.1} parent=95 // pred_check
          %p1606 = pneg %p455
        $region98: #{transformer_block.1} parent=95 // pred_check_branch
          %1608 = sbr.rel (%p1606) target = $region100
        $region99: #{transformer_block.1} parent=95 // pred_region
          %s1610 = ssub.s32 128, 128
          %1611 = vsyncadd %s1602, %s1610
          %s1612 = smul.addr %s33, 128
          %s1613 = scalar_lea.hbm %s19, %s1612
          %s1615 = sshll.u32 %s1605, 4
          %s1616 = int_to_ptr.vmem [resolvable:$true] %s1615
          %1618 = dma.vmem_to_hbm [thread:$0]  %s1616, 128, %s1613, %s1602
        $region100: #{transformer_block.1} parent=95 // pred_fallthru
          _
      $region96: #{transformer_block.1} parent=5 // pred_fallthru
        _
      %p1619 = scmp.le.s32.totalorder 2, %s28
      // Predicated region
      $region101: #{transformer_block.1} parent=5 // pred_check
        %p1620 = pneg %p1619
      $region102: #{transformer_block.1} parent=5 // pred_check_branch
        %1622 = sbr.rel (%p1620) target = $region104
      $region103: #{transformer_block.1} parent=5 // pred_region
        %s1623 = ssub.s32 %s28, 2
        // Predicated region
        $region105: #{transformer_block.1} parent=103 // pred_check
          %p1624 = pneg %p461
        $region106: #{transformer_block.1} parent=103 // pred_check_branch
          %1626 = sbr.rel (%p1624) target = $region108
        $region107: #{transformer_block.1} parent=103 // pred_region
          %s1627 = sand.u32 %s446, 1
          %s1628 = scalar_lea.sflag [#allocation3], %s1627
          %s1629 = sand.u32 %s446, 1
          %s1630 = smul.addr %s1629, 8
          %s1631 = scalar_lea.vmem [#allocation2], %s1630
          %1632 = dma.done %s1628, 128
        $region108: #{transformer_block.1} parent=103 // pred_fallthru
          _
      $region104: #{transformer_block.1} parent=5 // pred_fallthru
        _
    $region6: #{transformer_block.1} parent=1 // loop_footer
      %s32 = sadd.s32 1, %s28
    $region7: #{transformer_block.1} parent=1 // loop_footer_branch
      %27 = sbr.rel target = $region3
    $region8: #{transformer_block.1} parent=1 // loop_exit
      _
    %1633 = vsyncpa [#allocation3], 1
    %s1634 = scalar_lea.sflag [#allocation3], 1
    %1635 = vsyncpa %s1634, 1

</llo_original>
